<compile_context>
chip_gen: v6e
topology: v6e:2x2x1
jax: 0.10.0
libtpu: 0.0.40
codegen_flags: <defaults>
</compile_context>

<pallas_src>
import functools

import jax
import jax.numpy as jnp
from jax.experimental import pallas as pl
from jax.experimental.pallas import tpu as pltpu


# --------------------------------------------------------------------------- helpers
def _nbytes(shape, dtype):
    n = 1
    for s in shape:
        n *= s
    return n * jnp.dtype(dtype).itemsize


def _vmem_capacity_bytes() -> int:
    """Per-core VMEM capacity; conservative 64 MiB (v7x) fallback."""
    try:
        cap = int(pltpu.get_tpu_info().vmem_capacity_bytes)
        if cap > 0:
            return cap
    except Exception:
        pass
    return 64 * 2 ** 20


def _row_tile(n: int, cap: int, *, prefer_two_tiles: bool = True) -> int:
    """Largest divisor of n <= cap.  Prefers multiples of 16 (bf16 sublane packing),
    then 8; prefers leaving >= 2 tiles when an aligned divisor <= n//2 exists so
    'parallel' grid axes can be sharded across v7x's 2 TensorCores; never exceeds
    the cap unless only the full extent divides."""
    def largest(limit, align):
        limit = min(limit, n)
        limit -= limit % align
        for t in range(limit, 0, -align):
            if n % t == 0:
                return t
        return None

    search = []
    if prefer_two_tiles and n >= 32:
        half = min(cap, n // 2)
        search += [(half, 16), (half, 8)]
    search += [(cap, 16), (cap, 8)]
    for limit, align in search:
        t = largest(limit, align)
        if t is not None:
            return t
    if n <= cap:
        return n
    return largest(cap, 1) or n


def _pick_tile(n, cap, est_fn, budget):
    """Shrink the row tile until the VMEM estimate fits the budget."""
    t = _row_tile(n, cap)
    while est_fn(t) > budget:
        smaller = _row_tile(n, max(8, t // 2))
        if smaller >= t:
            break
        t = smaller
    return t


def _compiler_params(semantics, est_bytes, vmem_cap):
    # Size scoped VMEM from the actual estimate (x2 slack), but leave headroom
    # below the physical per-core capacity (64 MiB on v7x, 128 MiB on v5e/v6e).
    limit = int(min(int(0.85 * vmem_cap), max(32 * 2 ** 20, 2 * int(est_bytes))))
    return pltpu.CompilerParams(dimension_semantics=semantics,
                                vmem_limit_bytes=limit)


def _sigmoid(x):
    # sigmoid via tanh identity: 1 EUP pass instead of exp + divide.
    return 0.5 * (1.0 + jnp.tanh(0.5 * x))


# --------------------------------------------------------------------------- kernels
def enc_gru_kernel(xw_ref, wp_ref, bp_ref, wih_ref, bih_ref, whh_ref, bhn_ref,
                   h_out_ref, h_scr):
    """One encoder-GRU time step per grid point along the streamed ('arbitrary') axis.

    xw_ref : (1, TB, P) bf16  patched, last-value-subtracted inputs for step t
    wp_ref : (P, D) bf16,  bp_ref : (1, D)  f32   patch linear
    wih_ref: (D, 3D) bf16, bih_ref: (1, 3D) f32   input gates r|z|n (b_hr/b_hz folded in)
    whh_ref: (D, 3D) bf16, bhn_ref: (1, D)  f32   recurrent gates, ONE fused matmul
    h_out_ref: (TB, D) f32   final hidden state, written at t == N-1
    h_scr    : (TB, D) f32 VMEM   carried hidden state
    """
    D = wp_ref.shape[1]
    t = pl.program_id(1)

    @pl.when(t == 0)
    def _():
        h_scr[...] = jnp.zeros_like(h_scr)

    # Input projection: no dependence on h, so it does not lengthen the serial chain.
    e = jnp.dot(xw_ref[0], wp_ref[...], preferred_element_type=jnp.float32)
    e = jnp.maximum(e + bp_ref[...], 0.0)                                  # ReLU
    gi = jnp.dot(e.astype(jnp.bfloat16), wih_ref[...],
                 preferred_element_type=jnp.float32) + bih_ref[...]        # (TB, 3D) f32

    h = h_scr[...]
    gh = jnp.dot(h.astype(jnp.bfloat16), whh_ref[...],
                 preferred_element_type=jnp.float32)                       # (TB, 3D) f32

    r = _sigmoid(gi[:, 0:D] + gh[:, 0:D])
    z = _sigmoid(gi[:, D:2 * D] + gh[:, D:2 * D])
    n = jnp.tanh(gi[:, 2 * D:3 * D] + r * (gh[:, 2 * D:3 * D] + bhn_ref[...]))
    h_new = (1.0 - z) * n + z * h
    h_scr[...] = h_new

    @pl.when(t == pl.num_programs(1) - 1)
    def _():
        h_out_ref[...] = h_new


def decoder_kernel(h_ref, pos_ref, ch_ref, pwih_pos_ref, pwih_ch_ref, pbih_ref,
                   pwhh_ref, pbhn_ref, wr_ref, br_ref, out_ref):
    """Single-step GRU decoder + readout; dec_in/h0 rebuilt from structure.

    h_ref    : (TD, D)   f32   encoder hidden rows (bc = b*C + c)
    pos_ref  : (M, D/2)  bf16, ch_ref: (TD, D/2) bf16 (channel_emb tiled over b)
    pwih_pos / pwih_ch : (D/2, 3D) bf16 (row halves of pred_gru W_ih^T)
    pbih_ref : (1, 3D) f32 (b_ih with recurrent r/z biases folded in)
    pwhh_ref : (D, 3D) bf16, pbhn_ref: (1, D) f32
    wr_ref   : (D, P)  bf16, br_ref  : (1, P) f32
    out_ref  : (TD, M*P) f32   row bc, columns m*P..(m+1)*P  (single lane-dense store)
    """
    D = pwhh_ref.shape[0]
    M = pos_ref.shape[0]

    h = h_ref[...]
    gh = jnp.dot(h.astype(jnp.bfloat16), pwhh_ref[...],
                 preferred_element_type=jnp.float32)                       # (TD, 3D)
    gic = jnp.dot(ch_ref[...], pwih_ch_ref[...],
                  preferred_element_type=jnp.float32)                      # (TD, 3D)
    gip = (jnp.dot(pos_ref[...], pwih_pos_ref[...],
                   preferred_element_type=jnp.float32) + pbih_ref[...])    # (M, 3D)

    gh_r, gh_z = gh[:, 0:D], gh[:, D:2 * D]
    gh_n = gh[:, 2 * D:3 * D] + pbhn_ref[...]
    gic_r, gic_z, gic_n = gic[:, 0:D], gic[:, D:2 * D], gic[:, 2 * D:3 * D]

    # TODO(synk): nn.Dropout is treated as identity (inference / eval mode).
    ys = []
    for m in range(M):                                   # static, small (pred_len // patch_len)
        r = _sigmoid(gic_r + gip[m:m + 1, 0:D] + gh_r)
        z = _sigmoid(gic_z + gip[m:m + 1, D:2 * D] + gh_z)
        n = jnp.tanh(gic_n + gip[m:m + 1, 2 * D:3 * D] + r * gh_n)
        h_new = (1.0 - z) * n + z * h
        ys.append(jnp.dot(h_new.astype(jnp.bfloat16), wr_ref[...],
                          preferred_element_type=jnp.float32) + br_ref[...])
    out_ref[...] = jnp.concatenate(ys, axis=-1).astype(out_ref.dtype)


# --------------------------------------------------------------------------- wrapper
@functools.partial(jax.jit, static_argnames=("seq_len", "pred_len", "patch_len", "d_model"))
def rec_enc_forward(x, params, *, seq_len, pred_len, patch_len, d_model):
    B, L, C = x.shape
    assert L == seq_len and seq_len % patch_len == 0 and pred_len % patch_len == 0
    N = seq_len // patch_len
    M = pred_len // patch_len
    P, D = patch_len, d_model
    Dh = D // 2
    BC = B * C
    f32, bf16 = jnp.float32, jnp.bfloat16
    vmem_cap = _vmem_capacity_bytes()
    budget = int(0.6 * vmem_cap)

    # ---- glue: de-mean by last value; patchify with a SINGLE materializing transpose ----
    seq_last = x[:, -1:, :]                                               # (B, 1, C)
    xs = (x - seq_last).astype(f32)
    # (B, L, C) -> (B, N, P, C) -> (N, B, C, P) -> (N, B*C, P); bc = b*C + c
    xw = jnp.transpose(xs.reshape(B, N, P, C), (1, 0, 3, 2)).reshape(N, BC, P).astype(bf16)

    # ---- encoder weights: bf16 matmul operands, f32 biases, r/z recurrent bias folded ----
    wp = params["wp"].astype(bf16)
    wih = params["wih"].astype(bf16)
    whh = params["whh"].astype(bf16)
    bih_fold = params["bih"] + jnp.concatenate(
        [params["bhh"][:, 0:2 * D], jnp.zeros((1, D), f32)], axis=-1)
    bhn = params["bhh"][:, 2 * D:3 * D]

    # ---- kernel 1: fused patch-linear + ReLU + input gates + GRU recurrence ----
    def enc_bytes(tb):
        return (2 * _nbytes((1, tb, P), bf16)
                + 2 * (_nbytes((P, D), bf16) + 2 * _nbytes((D, 3 * D), bf16))
                + 2 * (2 * _nbytes((1, D), f32) + _nbytes((1, 3 * D), f32))
                + 3 * _nbytes((tb, D), f32)              # h_out (x2 buffers) + h scratch
                + 14 * _nbytes((tb, D), f32))            # e, gi, gh, r, z, n, h_new f32 temps

    tb = _pick_tile(BC, 512, enc_bytes, budget)

    def w_full(shape):
        return pl.BlockSpec(shape, lambda i, t, _n=len(shape): (0,) * _n)

    h = pl.pallas_call(
        enc_gru_kernel,
        grid=(BC // tb, N),
        in_specs=[pl.BlockSpec((1, tb, P), lambda i, t: (t, i, 0)),
                  w_full((P, D)), w_full((1, D)),
                  w_full((D, 3 * D)), w_full((1, 3 * D)),
                  w_full((D, 3 * D)), w_full((1, D))],
        out_specs=pl.BlockSpec((tb, D), lambda i, t: (i, 0)),
        out_shape=jax.ShapeDtypeStruct((BC, D), f32),
        scratch_shapes=[pltpu.VMEM((tb, D), f32)],
        compiler_params=_compiler_params(("parallel", "arbitrary"),
                                         enc_bytes(tb), vmem_cap),
    )(xw, wp, params["bp"], wih, bih_fold, whh, bhn)

    # ---- kernel 2: decoder GRU step + readout, built from (pos, channel) structure ----
    ch_rep = jnp.tile(params["channel_emb"], (B, 1)).astype(bf16)         # (BC, Dh), tiny
    pos = params["pos_emb"].astype(bf16)                                  # (M, Dh)
    pwih_pos = params["pwih"][0:Dh, :].astype(bf16)
    pwih_ch = params["pwih"][Dh:D, :].astype(bf16)
    pwhh = params["pwhh"].astype(bf16)
    pbih_fold = params["pbih"] + jnp.concatenate(
        [params["pbhh"][:, 0:2 * D], jnp.zeros((1, D), f32)], axis=-1)
    pbhn = params["pbhh"][:, 2 * D:3 * D]
    wr = params["wr"].astype(bf16)

    def dec_bytes(td):
        return (2 * (_nbytes((td, D), f32) + _nbytes((td, Dh), bf16)
                     + _nbytes((td, M * P), f32))
                + 2 * (_nbytes((M, Dh), bf16) + 2 * _nbytes((Dh, 3 * D), bf16)
                       + _nbytes((D, 3 * D), bf16) + _nbytes((1, 3 * D), f32)
                       + _nbytes((1, D), f32) + _nbytes((D, P), bf16)
                       + _nbytes((1, P), f32))
                + 11 * _nbytes((td, D), f32)             # gh, gic, r, z, n, h_new f32 temps
                + 2 * _nbytes((td, M * P), f32))         # per-m readouts + concatenated slab

    td = _pick_tile(BC, 512, dec_bytes, budget)

    def d_full(shape):
        return pl.BlockSpec(shape, lambda i, _n=len(shape): (0,) * _n)

    yw = pl.pallas_call(
        decoder_kernel,
        grid=(BC // td,),
        in_specs=[pl.BlockSpec((td, D), lambda i: (i, 0)),
                  d_full((M, Dh)),
                  pl.BlockSpec((td, Dh), lambda i: (i, 0)),
                  d_full((Dh, 3 * D)), d_full((Dh, 3 * D)), d_full((1, 3 * D)),
                  d_full((D, 3 * D)), d_full((1, D)),
                  d_full((D, P)), d_full((1, P))],
        out_specs=pl.BlockSpec((td, M * P), lambda i: (i, 0)),
        out_shape=jax.ShapeDtypeStruct((BC, M * P), f32),
        compiler_params=_compiler_params(("parallel",), dec_bytes(td), vmem_cap),
    )(h, pos, ch_rep, pwih_pos, pwih_ch, pbih_fold, pwhh, pbhn, wr, params["br"])

    # ---- glue: un-patchify (free reshape + one transpose) and add the last value back ----
    y = jnp.transpose(yw.reshape(B, C, M * P), (0, 2, 1))                 # (B, pred_len, C)
    return y + seq_last


# --------------------------------------------------------------------------- reference (pure JAX, f32)
def rec_enc_reference(x, params, *, seq_len, pred_len, patch_len, d_model):
    B, L, C = x.shape
    N = seq_len // patch_len
    M = pred_len // patch_len
    P, D = patch_len, d_model

    seq_last = x[:, -1:, :]
    xs = x - seq_last
    xw = jnp.transpose(xs, (0, 2, 1)).reshape(B * C, N, P)

    def gru_cell(x_t, h, wih, whh, bih, bhh):
        gi = x_t @ wih + bih
        gh = h @ whh + bhh
        r = jax.nn.sigmoid(gi[:, :D] + gh[:, :D])
        z = jax.nn.sigmoid(gi[:, D:2 * D] + gh[:, D:2 * D])
        n = jnp.tanh(gi[:, 2 * D:] + r * gh[:, 2 * D:])
        return (1.0 - z) * n + z * h

    h = jnp.zeros((B * C, D), jnp.float32)
    for t in range(N):
        e = jax.nn.relu(xw[:, t, :] @ params["wp"] + params["bp"])
        h = gru_cell(e, h, params["wih"], params["whh"], params["bih"], params["bhh"])

    h0 = jnp.repeat(h, M, axis=0)
    pos = jnp.broadcast_to(params["pos_emb"][None, :, :], (B * C, M, D // 2))
    ch = jnp.broadcast_to(jnp.tile(params["channel_emb"], (B, 1))[:, None, :],
                          (B * C, M, D // 2))
    dec_in = jnp.concatenate([pos, ch], axis=-1).reshape(B * C * M, D)

    h_new = gru_cell(dec_in, h0, params["pwih"], params["pwhh"],
                     params["pbih"], params["pbhh"])
    yw = h_new @ params["wr"] + params["br"]
    y = jnp.transpose(yw.reshape(B, C, M * P), (0, 2, 1))
    return y + seq_last


# --------------------------------------------------------------------------- params
def init_params(key, *, patch_len, d_model, n_channels, pred_len):
    P, D, M = patch_len, d_model, pred_len // patch_len
    ks = jax.random.split(key, 14)
    s = 0.1

    def rnd(k, shape):
        return (s * jax.random.normal(k, shape)).astype(jnp.float32)

    return {
        # linear_patch: torch weight (D, P) -> stored transposed (P, D)
        "wp": rnd(ks[0], (P, D)),
        "bp": rnd(ks[1], (1, D)),
        # encoder GRU: torch weight_ih (3D, D) -> transposed (D, 3D), gate order r|z|n
        "wih": rnd(ks[2], (D, 3 * D)),
        "whh": rnd(ks[3], (D, 3 * D)),
        "bih": rnd(ks[4], (1, 3 * D)),
        "bhh": rnd(ks[5], (1, 3 * D)),
        # decoder (pred) GRU
        "pwih": rnd(ks[6], (D, 3 * D)),
        "pwhh": rnd(ks[7], (D, 3 * D)),
        "pbih": rnd(ks[8], (1, 3 * D)),
        "pbhh": rnd(ks[9], (1, 3 * D)),
        # embeddings
        "pos_emb": rnd(ks[10], (M, D // 2)),
        "channel_emb": rnd(ks[11], (n_channels, D // 2)),
        # linear_patch_re: torch weight (P, D) -> transposed (D, P)
        "wr": rnd(ks[12], (D, P)),
        "br": rnd(ks[13], (1, P)),
    }


# --------------------------------------------------------------------------- main
if __name__ == "__main__":
    B, C = 2, 4
    seq_len, pred_len, patch_len, d_model = 16, 8, 4, 32

    key = jax.random.PRNGKey(0)
    k_x, k_p = jax.random.split(key)
    x = jax.random.normal(k_x, (B, seq_len, C), dtype=jnp.float32)
    params = init_params(k_p, patch_len=patch_len, d_model=d_model,
                         n_channels=C, pred_len=pred_len)

    y = rec_enc_forward(x, params, seq_len=seq_len, pred_len=pred_len,
                        patch_len=patch_len, d_model=d_model)
    y = jax.block_until_ready(y)

    y_ref = rec_enc_reference(x, params, seq_len=seq_len, pred_len=pred_len,
                              patch_len=patch_len, d_model=d_model)

    assert y.shape == (B, pred_len, C), y.shape
    max_err = float(jnp.max(jnp.abs(y - y_ref)))
    # bf16 matmul operands / f32 accumulation & gate math -> relaxed tolerance
    assert jnp.allclose(y, y_ref, atol=3e-2, rtol=3e-2), max_err
    print("KERNEL_OK")
</pallas_src>

<mosaic_0001>
module attributes {stable_mosaic.version = 11 : i64} {
  func.func @enc_gru_kernel(%arg0: i32, %arg1: i32, %arg2: memref<1x8x4xbf16, #tpu.memory_space<vmem>>, %arg3: memref<4x32xbf16, #tpu.memory_space<vmem>>, %arg4: memref<1x32xf32, #tpu.memory_space<vmem>>, %arg5: memref<32x96xbf16, #tpu.memory_space<vmem>>, %arg6: memref<1x96xf32, #tpu.memory_space<vmem>>, %arg7: memref<32x96xbf16, #tpu.memory_space<vmem>>, %arg8: memref<1x32xf32, #tpu.memory_space<vmem>>, %arg9: memref<8x32xf32, #tpu.memory_space<vmem>>, %arg10: memref<8x32xf32, #tpu.memory_space<vmem>>) attributes {dimension_semantics = [#tpu.dimension_semantics<parallel>, #tpu.dimension_semantics<arbitrary>], iteration_bounds = array<i64: 1, 4>, scalar_prefetch = 0 : i64, scratch_operands = 1 : i64, tpu.core_type = #tpu.core_type<tc>, window_params = [{transform_indices = @transform_0, window_bounds = array<i64: 1, 8, 4>}, {pipeline_mode = #tpu.pipeline_mode<synchronous>, transform_indices = @transform_1, window_bounds = array<i64: 4, 32>}, {pipeline_mode = #tpu.pipeline_mode<synchronous>, transform_indices = @transform_2, window_bounds = array<i64: 1, 32>}, {pipeline_mode = #tpu.pipeline_mode<synchronous>, transform_indices = @transform_3, window_bounds = array<i64: 32, 96>}, {pipeline_mode = #tpu.pipeline_mode<synchronous>, transform_indices = @transform_4, window_bounds = array<i64: 1, 96>}, {pipeline_mode = #tpu.pipeline_mode<synchronous>, transform_indices = @transform_5, window_bounds = array<i64: 32, 96>}, {pipeline_mode = #tpu.pipeline_mode<synchronous>, transform_indices = @transform_6, window_bounds = array<i64: 1, 32>}, {transform_indices = @transform_7, window_bounds = array<i64: 8, 32>}]} {
    %c0_i32 = arith.constant 0 : i32
    %0 = arith.cmpi eq, %arg1, %c0_i32 : i32
    %1 = arith.extui %0 : i1 to i32
    %c0_i32_0 = arith.constant 0 : i32
    %2 = arith.cmpi ne, %1, %c0_i32_0 : i32
    scf.if %2 {
      %cst_30 = arith.constant 0.000000e+00 : f32
      %59 = vector.broadcast %cst_30 : f32 to vector<8x32xf32>
      %c0_31 = arith.constant 0 : index
      %c0_32 = arith.constant 0 : index
      %60 = vector.load %arg10[%c0_31, %c0_32] : memref<8x32xf32, #tpu.memory_space<vmem>>, vector<8x32xf32>
      tpu.vector_store %arg10[%c0_31, %c0_32], %59 {strides = array<i32>} : memref<8x32xf32, #tpu.memory_space<vmem>>, vector<8x32xf32>,
    } else {
    }
    %c0 = arith.constant 0 : index
    %c0_1 = arith.constant 0 : index
    %c0_2 = arith.constant 0 : index
    %3 = vector.load %arg2[%c0, %c0_1, %c0_2] : memref<1x8x4xbf16, #tpu.memory_space<vmem>>, vector<1x8x4xbf16>
    %4 = vector.shape_cast %3 : vector<1x8x4xbf16> to vector<8x4xbf16>
    %c0_3 = arith.constant 0 : index
    %c0_4 = arith.constant 0 : index
    %5 = vector.load %arg3[%c0_3, %c0_4] : memref<4x32xbf16, #tpu.memory_space<vmem>>, vector<4x32xbf16>
    %cst = arith.constant dense<0.000000e+00> : vector<8x32xf32>
    %6 = tpu.matmul %4, %5, %cst {dimension_numbers = #tpu.dot_dimension_numbers<[1], [0], [0], [1], [0, 0, 1, 1], [], []>} : vector<8x4xbf16>, vector<4x32xbf16>, vector<8x32xf32> -> vector<8x32xf32>
    %c0_5 = arith.constant 0 : index
    %c0_6 = arith.constant 0 : index
    %7 = vector.load %arg4[%c0_5, %c0_6] : memref<1x32xf32, #tpu.memory_space<vmem>>, vector<1x32xf32>
    %8 = vector.broadcast %7 : vector<1x32xf32> to vector<8x32xf32>
    %9 = arith.addf %6, %8 : vector<8x32xf32>
    %cst_7 = arith.constant 0.000000e+00 : f32
    %10 = vector.broadcast %cst_7 : f32 to vector<8x32xf32>
    %11 = arith.maximumf %9, %10 : vector<8x32xf32>
    %12 = arith.truncf %11 : vector<8x32xf32> to vector<8x32xbf16>
    %c0_8 = arith.constant 0 : index
    %c0_9 = arith.constant 0 : index
    %13 = vector.load %arg5[%c0_8, %c0_9] : memref<32x96xbf16, #tpu.memory_space<vmem>>, vector<32x96xbf16>
    %cst_10 = arith.constant dense<0.000000e+00> : vector<8x96xf32>
    %14 = tpu.matmul %12, %13, %cst_10 {dimension_numbers = #tpu.dot_dimension_numbers<[1], [0], [0], [1], [0, 0, 1, 1], [], []>} : vector<8x32xbf16>, vector<32x96xbf16>, vector<8x96xf32> -> vector<8x96xf32>
    %c0_11 = arith.constant 0 : index
    %c0_12 = arith.constant 0 : index
    %15 = vector.load %arg6[%c0_11, %c0_12] : memref<1x96xf32, #tpu.memory_space<vmem>>, vector<1x96xf32>
    %16 = vector.broadcast %15 : vector<1x96xf32> to vector<8x96xf32>
    %17 = arith.addf %14, %16 : vector<8x96xf32>
    %c0_13 = arith.constant 0 : index
    %c0_14 = arith.constant 0 : index
    %18 = vector.load %arg10[%c0_13, %c0_14] : memref<8x32xf32, #tpu.memory_space<vmem>>, vector<8x32xf32>
    %19 = arith.truncf %18 : vector<8x32xf32> to vector<8x32xbf16>
    %c0_15 = arith.constant 0 : index
    %c0_16 = arith.constant 0 : index
    %20 = vector.load %arg7[%c0_15, %c0_16] : memref<32x96xbf16, #tpu.memory_space<vmem>>, vector<32x96xbf16>
    %cst_17 = arith.constant dense<0.000000e+00> : vector<8x96xf32>
    %21 = tpu.matmul %19, %20, %cst_17 {dimension_numbers = #tpu.dot_dimension_numbers<[1], [0], [0], [1], [0, 0, 1, 1], [], []>} : vector<8x32xbf16>, vector<32x96xbf16>, vector<8x96xf32> -> vector<8x96xf32>
    %22 = vector.extract_strided_slice %17 {offsets = [0, 0], sizes = [8, 32], strides = [1, 1]} : vector<8x96xf32> to vector<8x32xf32>
    %23 = vector.extract_strided_slice %21 {offsets = [0, 0], sizes = [8, 32], strides = [1, 1]} : vector<8x96xf32> to vector<8x32xf32>
    %24 = arith.addf %22, %23 : vector<8x32xf32>
    %cst_18 = arith.constant 5.000000e-01 : f32
    %25 = vector.broadcast %cst_18 : f32 to vector<8x32xf32>
    %26 = arith.mulf %25, %24 : vector<8x32xf32>
    %27 = math.tanh %26 : vector<8x32xf32>
    %cst_19 = arith.constant 1.000000e+00 : f32
    %28 = vector.broadcast %cst_19 : f32 to vector<8x32xf32>
    %29 = arith.addf %28, %27 : vector<8x32xf32>
    %cst_20 = arith.constant 5.000000e-01 : f32
    %30 = vector.broadcast %cst_20 : f32 to vector<8x32xf32>
    %31 = arith.mulf %30, %29 : vector<8x32xf32>
    %32 = vector.extract_strided_slice %17 {offsets = [0, 32], sizes = [8, 32], strides = [1, 1]} : vector<8x96xf32> to vector<8x32xf32>
    %33 = vector.extract_strided_slice %21 {offsets = [0, 32], sizes = [8, 32], strides = [1, 1]} : vector<8x96xf32> to vector<8x32xf32>
    %34 = arith.addf %32, %33 : vector<8x32xf32>
    %cst_21 = arith.constant 5.000000e-01 : f32
    %35 = vector.broadcast %cst_21 : f32 to vector<8x32xf32>
    %36 = arith.mulf %35, %34 : vector<8x32xf32>
    %37 = math.tanh %36 : vector<8x32xf32>
    %cst_22 = arith.constant 1.000000e+00 : f32
    %38 = vector.broadcast %cst_22 : f32 to vector<8x32xf32>
    %39 = arith.addf %38, %37 : vector<8x32xf32>
    %cst_23 = arith.constant 5.000000e-01 : f32
    %40 = vector.broadcast %cst_23 : f32 to vector<8x32xf32>
    %41 = arith.mulf %40, %39 : vector<8x32xf32>
    %42 = vector.extract_strided_slice %17 {offsets = [0, 64], sizes = [8, 32], strides = [1, 1]} : vector<8x96xf32> to vector<8x32xf32>
    %43 = vector.extract_strided_slice %21 {offsets = [0, 64], sizes = [8, 32], strides = [1, 1]} : vector<8x96xf32> to vector<8x32xf32>
    %c0_24 = arith.constant 0 : index
    %c0_25 = arith.constant 0 : index
    %44 = vector.load %arg8[%c0_24, %c0_25] : memref<1x32xf32, #tpu.memory_space<vmem>>, vector<1x32xf32>
    %45 = vector.broadcast %44 : vector<1x32xf32> to vector<8x32xf32>
    %46 = arith.addf %43, %45 : vector<8x32xf32>
    %47 = arith.mulf %31, %46 : vector<8x32xf32>
    %48 = arith.addf %42, %47 : vector<8x32xf32>
    %49 = math.tanh %48 : vector<8x32xf32>
    %cst_26 = arith.constant 1.000000e+00 : f32
    %50 = vector.broadcast %cst_26 : f32 to vector<8x32xf32>
    %51 = arith.subf %50, %41 : vector<8x32xf32>
    %52 = arith.mulf %51, %49 : vector<8x32xf32>
    %53 = arith.mulf %41, %18 : vector<8x32xf32>
    %54 = arith.addf %52, %53 : vector<8x32xf32>
    %c0_27 = arith.constant 0 : index
    %c0_28 = arith.constant 0 : index
    %55 = vector.load %arg10[%c0_27, %c0_28] : memref<8x32xf32, #tpu.memory_space<vmem>>, vector<8x32xf32>
    tpu.vector_store %arg10[%c0_27, %c0_28], %54 {strides = array<i32>} : memref<8x32xf32, #tpu.memory_space<vmem>>, vector<8x32xf32>,
    %c3_i32 = arith.constant 3 : i32
    %56 = arith.cmpi eq, %arg1, %c3_i32 : i32
    %57 = arith.extui %56 : i1 to i32
    %c0_i32_29 = arith.constant 0 : i32
    %58 = arith.cmpi ne, %57, %c0_i32_29 : i32
    scf.if %58 {
      %c0_30 = arith.constant 0 : index
      %c0_31 = arith.constant 0 : index
      %59 = vector.load %arg9[%c0_30, %c0_31] : memref<8x32xf32, #tpu.memory_space<vmem>>, vector<8x32xf32>
      tpu.vector_store %arg9[%c0_30, %c0_31], %54 {strides = array<i32>} : memref<8x32xf32, #tpu.memory_space<vmem>>, vector<8x32xf32>,
    } else {
    }
    return
  }
  func.func @transform_0(%arg0: i32, %arg1: i32) -> (i32, i32, i32) {
    %c0_i32 = arith.constant 0 : i32
    %c0_i32_0 = arith.constant 0 : i32
    return %arg1, %arg0, %c0_i32 : i32, i32, i32
  }
  func.func @transform_1(%arg0: i32, %arg1: i32) -> (i32, i32) {
    %c0_i32 = arith.constant 0 : i32
    %c0_i32_0 = arith.constant 0 : i32
    %c0_i32_1 = arith.constant 0 : i32
    return %c0_i32, %c0_i32_0 : i32, i32
  }
  func.func @transform_2(%arg0: i32, %arg1: i32) -> (i32, i32) {
    %c0_i32 = arith.constant 0 : i32
    %c0_i32_0 = arith.constant 0 : i32
    %c0_i32_1 = arith.constant 0 : i32
    return %c0_i32, %c0_i32_0 : i32, i32
  }
  func.func @transform_3(%arg0: i32, %arg1: i32) -> (i32, i32) {
    %c0_i32 = arith.constant 0 : i32
    %c0_i32_0 = arith.constant 0 : i32
    %c0_i32_1 = arith.constant 0 : i32
    return %c0_i32, %c0_i32_0 : i32, i32
  }
  func.func @transform_4(%arg0: i32, %arg1: i32) -> (i32, i32) {
    %c0_i32 = arith.constant 0 : i32
    %c0_i32_0 = arith.constant 0 : i32
    %c0_i32_1 = arith.constant 0 : i32
    return %c0_i32, %c0_i32_0 : i32, i32
  }
  func.func @transform_5(%arg0: i32, %arg1: i32) -> (i32, i32) {
    %c0_i32 = arith.constant 0 : i32
    %c0_i32_0 = arith.constant 0 : i32
    %c0_i32_1 = arith.constant 0 : i32
    return %c0_i32, %c0_i32_0 : i32, i32
  }
  func.func @transform_6(%arg0: i32, %arg1: i32) -> (i32, i32) {
    %c0_i32 = arith.constant 0 : i32
    %c0_i32_0 = arith.constant 0 : i32
    %c0_i32_1 = arith.constant 0 : i32
    return %c0_i32, %c0_i32_0 : i32, i32
  }
  func.func @transform_7(%arg0: i32, %arg1: i32) -> (i32, i32) {
    %c0_i32 = arith.constant 0 : i32
    %c0_i32_0 = arith.constant 0 : i32
    return %arg0, %c0_i32 : i32, i32
  }
}

module attributes {stable_mosaic.version = 11 : i64} {
  func.func @decoder_kernel(%arg0: i32, %arg1: memref<8x32xf32, #tpu.memory_space<vmem>>, %arg2: memref<2x16xbf16, #tpu.memory_space<vmem>>, %arg3: memref<8x16xbf16, #tpu.memory_space<vmem>>, %arg4: memref<16x96xbf16, #tpu.memory_space<vmem>>, %arg5: memref<16x96xbf16, #tpu.memory_space<vmem>>, %arg6: memref<1x96xf32, #tpu.memory_space<vmem>>, %arg7: memref<32x96xbf16, #tpu.memory_space<vmem>>, %arg8: memref<1x32xf32, #tpu.memory_space<vmem>>, %arg9: memref<32x4xbf16, #tpu.memory_space<vmem>>, %arg10: memref<1x4xf32, #tpu.memory_space<vmem>>, %arg11: memref<8x8xf32, #tpu.memory_space<vmem>>) attributes {dimension_semantics = [#tpu.dimension_semantics<parallel>], iteration_bounds = array<i64: 1>, scalar_prefetch = 0 : i64, scratch_operands = 0 : i64, tpu.core_type = #tpu.core_type<tc>, window_params = [{transform_indices = @transform_0, window_bounds = array<i64: 8, 32>}, {pipeline_mode = #tpu.pipeline_mode<synchronous>, transform_indices = @transform_1, window_bounds = array<i64: 2, 16>}, {transform_indices = @transform_2, window_bounds = array<i64: 8, 16>}, {pipeline_mode = #tpu.pipeline_mode<synchronous>, transform_indices = @transform_3, window_bounds = array<i64: 16, 96>}, {pipeline_mode = #tpu.pipeline_mode<synchronous>, transform_indices = @transform_4, window_bounds = array<i64: 16, 96>}, {pipeline_mode = #tpu.pipeline_mode<synchronous>, transform_indices = @transform_5, window_bounds = array<i64: 1, 96>}, {pipeline_mode = #tpu.pipeline_mode<synchronous>, transform_indices = @transform_6, window_bounds = array<i64: 32, 96>}, {pipeline_mode = #tpu.pipeline_mode<synchronous>, transform_indices = @transform_7, window_bounds = array<i64: 1, 32>}, {pipeline_mode = #tpu.pipeline_mode<synchronous>, transform_indices = @transform_8, window_bounds = array<i64: 32, 4>}, {pipeline_mode = #tpu.pipeline_mode<synchronous>, transform_indices = @transform_9, window_bounds = array<i64: 1, 4>}, {transform_indices = @transform_10, window_bounds = array<i64: 8, 8>}]} {
    %c0 = arith.constant 0 : index
    %c0_0 = arith.constant 0 : index
    %0 = vector.load %arg1[%c0, %c0_0] : memref<8x32xf32, #tpu.memory_space<vmem>>, vector<8x32xf32>
    %1 = arith.truncf %0 : vector<8x32xf32> to vector<8x32xbf16>
    %c0_1 = arith.constant 0 : index
    %c0_2 = arith.constant 0 : index
    %2 = vector.load %arg7[%c0_1, %c0_2] : memref<32x96xbf16, #tpu.memory_space<vmem>>, vector<32x96xbf16>
    %cst = arith.constant dense<0.000000e+00> : vector<8x96xf32>
    %3 = tpu.matmul %1, %2, %cst {dimension_numbers = #tpu.dot_dimension_numbers<[1], [0], [0], [1], [0, 0, 1, 1], [], []>} : vector<8x32xbf16>, vector<32x96xbf16>, vector<8x96xf32> -> vector<8x96xf32>
    %c0_3 = arith.constant 0 : index
    %c0_4 = arith.constant 0 : index
    %4 = vector.load %arg3[%c0_3, %c0_4] : memref<8x16xbf16, #tpu.memory_space<vmem>>, vector<8x16xbf16>
    %c0_5 = arith.constant 0 : index
    %c0_6 = arith.constant 0 : index
    %5 = vector.load %arg5[%c0_5, %c0_6] : memref<16x96xbf16, #tpu.memory_space<vmem>>, vector<16x96xbf16>
    %cst_7 = arith.constant dense<0.000000e+00> : vector<8x96xf32>
    %6 = tpu.matmul %4, %5, %cst_7 {dimension_numbers = #tpu.dot_dimension_numbers<[1], [0], [0], [1], [0, 0, 1, 1], [], []>} : vector<8x16xbf16>, vector<16x96xbf16>, vector<8x96xf32> -> vector<8x96xf32>
    %c0_8 = arith.constant 0 : index
    %c0_9 = arith.constant 0 : index
    %7 = vector.load %arg2[%c0_8, %c0_9] : memref<2x16xbf16, #tpu.memory_space<vmem>>, vector<2x16xbf16>
    %c0_10 = arith.constant 0 : index
    %c0_11 = arith.constant 0 : index
    %8 = vector.load %arg4[%c0_10, %c0_11] : memref<16x96xbf16, #tpu.memory_space<vmem>>, vector<16x96xbf16>
    %cst_12 = arith.constant dense<0.000000e+00> : vector<2x96xf32>
    %9 = tpu.matmul %7, %8, %cst_12 {dimension_numbers = #tpu.dot_dimension_numbers<[1], [0], [0], [1], [0, 0, 1, 1], [], []>} : vector<2x16xbf16>, vector<16x96xbf16>, vector<2x96xf32> -> vector<2x96xf32>
    %c0_13 = arith.constant 0 : index
    %c0_14 = arith.constant 0 : index
    %10 = vector.load %arg6[%c0_13, %c0_14] : memref<1x96xf32, #tpu.memory_space<vmem>>, vector<1x96xf32>
    %11 = vector.broadcast %10 : vector<1x96xf32> to vector<2x96xf32>
    %12 = arith.addf %9, %11 : vector<2x96xf32>
    %13 = vector.extract_strided_slice %3 {offsets = [0, 0], sizes = [8, 32], strides = [1, 1]} : vector<8x96xf32> to vector<8x32xf32>
    %14 = vector.extract_strided_slice %3 {offsets = [0, 32], sizes = [8, 32], strides = [1, 1]} : vector<8x96xf32> to vector<8x32xf32>
    %15 = vector.extract_strided_slice %3 {offsets = [0, 64], sizes = [8, 32], strides = [1, 1]} : vector<8x96xf32> to vector<8x32xf32>
    %c0_15 = arith.constant 0 : index
    %c0_16 = arith.constant 0 : index
    %16 = vector.load %arg8[%c0_15, %c0_16] : memref<1x32xf32, #tpu.memory_space<vmem>>, vector<1x32xf32>
    %17 = vector.broadcast %16 : vector<1x32xf32> to vector<8x32xf32>
    %18 = arith.addf %15, %17 : vector<8x32xf32>
    %19 = vector.extract_strided_slice %6 {offsets = [0, 0], sizes = [8, 32], strides = [1, 1]} : vector<8x96xf32> to vector<8x32xf32>
    %20 = vector.extract_strided_slice %6 {offsets = [0, 32], sizes = [8, 32], strides = [1, 1]} : vector<8x96xf32> to vector<8x32xf32>
    %21 = vector.extract_strided_slice %6 {offsets = [0, 64], sizes = [8, 32], strides = [1, 1]} : vector<8x96xf32> to vector<8x32xf32>
    %22 = vector.extract_strided_slice %12 {offsets = [0, 0], sizes = [1, 32], strides = [1, 1]} : vector<2x96xf32> to vector<1x32xf32>
    %23 = vector.broadcast %22 : vector<1x32xf32> to vector<8x32xf32>
    %24 = arith.addf %19, %23 : vector<8x32xf32>
    %25 = arith.addf %24, %13 : vector<8x32xf32>
    %cst_17 = arith.constant 5.000000e-01 : f32
    %26 = vector.broadcast %cst_17 : f32 to vector<8x32xf32>
    %27 = arith.mulf %26, %25 : vector<8x32xf32>
    %28 = math.tanh %27 : vector<8x32xf32>
    %cst_18 = arith.constant 1.000000e+00 : f32
    %29 = vector.broadcast %cst_18 : f32 to vector<8x32xf32>
    %30 = arith.addf %29, %28 : vector<8x32xf32>
    %cst_19 = arith.constant 5.000000e-01 : f32
    %31 = vector.broadcast %cst_19 : f32 to vector<8x32xf32>
    %32 = arith.mulf %31, %30 : vector<8x32xf32>
    %33 = vector.extract_strided_slice %12 {offsets = [0, 32], sizes = [1, 32], strides = [1, 1]} : vector<2x96xf32> to vector<1x32xf32>
    %34 = vector.broadcast %33 : vector<1x32xf32> to vector<8x32xf32>
    %35 = arith.addf %20, %34 : vector<8x32xf32>
    %36 = arith.addf %35, %14 : vector<8x32xf32>
    %cst_20 = arith.constant 5.000000e-01 : f32
    %37 = vector.broadcast %cst_20 : f32 to vector<8x32xf32>
    %38 = arith.mulf %37, %36 : vector<8x32xf32>
    %39 = math.tanh %38 : vector<8x32xf32>
    %cst_21 = arith.constant 1.000000e+00 : f32
    %40 = vector.broadcast %cst_21 : f32 to vector<8x32xf32>
    %41 = arith.addf %40, %39 : vector<8x32xf32>
    %cst_22 = arith.constant 5.000000e-01 : f32
    %42 = vector.broadcast %cst_22 : f32 to vector<8x32xf32>
    %43 = arith.mulf %42, %41 : vector<8x32xf32>
    %44 = vector.extract_strided_slice %12 {offsets = [0, 64], sizes = [1, 32], strides = [1, 1]} : vector<2x96xf32> to vector<1x32xf32>
    %45 = vector.broadcast %44 : vector<1x32xf32> to vector<8x32xf32>
    %46 = arith.addf %21, %45 : vector<8x32xf32>
    %47 = arith.mulf %32, %18 : vector<8x32xf32>
    %48 = arith.addf %46, %47 : vector<8x32xf32>
    %49 = math.tanh %48 : vector<8x32xf32>
    %cst_23 = arith.constant 1.000000e+00 : f32
    %50 = vector.broadcast %cst_23 : f32 to vector<8x32xf32>
    %51 = arith.subf %50, %43 : vector<8x32xf32>
    %52 = arith.mulf %51, %49 : vector<8x32xf32>
    %53 = arith.mulf %43, %0 : vector<8x32xf32>
    %54 = arith.addf %52, %53 : vector<8x32xf32>
    %55 = arith.truncf %54 : vector<8x32xf32> to vector<8x32xbf16>
    %c0_24 = arith.constant 0 : index
    %c0_25 = arith.constant 0 : index
    %56 = vector.load %arg9[%c0_24, %c0_25] : memref<32x4xbf16, #tpu.memory_space<vmem>>, vector<32x4xbf16>
    %cst_26 = arith.constant dense<0.000000e+00> : vector<8x4xf32>
    %57 = tpu.matmul %55, %56, %cst_26 {dimension_numbers = #tpu.dot_dimension_numbers<[1], [0], [0], [1], [0, 0, 1, 1], [], []>} : vector<8x32xbf16>, vector<32x4xbf16>, vector<8x4xf32> -> vector<8x4xf32>
    %c0_27 = arith.constant 0 : index
    %c0_28 = arith.constant 0 : index
    %58 = vector.load %arg10[%c0_27, %c0_28] : memref<1x4xf32, #tpu.memory_space<vmem>>, vector<1x4xf32>
    %59 = vector.broadcast %58 : vector<1x4xf32> to vector<8x4xf32>
    %60 = arith.addf %57, %59 : vector<8x4xf32>
    %61 = vector.extract_strided_slice %12 {offsets = [1, 0], sizes = [1, 32], strides = [1, 1]} : vector<2x96xf32> to vector<1x32xf32>
    %62 = vector.broadcast %61 : vector<1x32xf32> to vector<8x32xf32>
    %63 = arith.addf %19, %62 : vector<8x32xf32>
    %64 = arith.addf %63, %13 : vector<8x32xf32>
    %cst_29 = arith.constant 5.000000e-01 : f32
    %65 = vector.broadcast %cst_29 : f32 to vector<8x32xf32>
    %66 = arith.mulf %65, %64 : vector<8x32xf32>
    %67 = math.tanh %66 : vector<8x32xf32>
    %cst_30 = arith.constant 1.000000e+00 : f32
    %68 = vector.broadcast %cst_30 : f32 to vector<8x32xf32>
    %69 = arith.addf %68, %67 : vector<8x32xf32>
    %cst_31 = arith.constant 5.000000e-01 : f32
    %70 = vector.broadcast %cst_31 : f32 to vector<8x32xf32>
    %71 = arith.mulf %70, %69 : vector<8x32xf32>
    %72 = vector.extract_strided_slice %12 {offsets = [1, 32], sizes = [1, 32], strides = [1, 1]} : vector<2x96xf32> to vector<1x32xf32>
    %73 = vector.broadcast %72 : vector<1x32xf32> to vector<8x32xf32>
    %74 = arith.addf %20, %73 : vector<8x32xf32>
    %75 = arith.addf %74, %14 : vector<8x32xf32>
    %cst_32 = arith.constant 5.000000e-01 : f32
    %76 = vector.broadcast %cst_32 : f32 to vector<8x32xf32>
    %77 = arith.mulf %76, %75 : vector<8x32xf32>
    %78 = math.tanh %77 : vector<8x32xf32>
    %cst_33 = arith.constant 1.000000e+00 : f32
    %79 = vector.broadcast %cst_33 : f32 to vector<8x32xf32>
    %80 = arith.addf %79, %78 : vector<8x32xf32>
    %cst_34 = arith.constant 5.000000e-01 : f32
    %81 = vector.broadcast %cst_34 : f32 to vector<8x32xf32>
    %82 = arith.mulf %81, %80 : vector<8x32xf32>
    %83 = vector.extract_strided_slice %12 {offsets = [1, 64], sizes = [1, 32], strides = [1, 1]} : vector<2x96xf32> to vector<1x32xf32>
    %84 = vector.broadcast %83 : vector<1x32xf32> to vector<8x32xf32>
    %85 = arith.addf %21, %84 : vector<8x32xf32>
    %86 = arith.mulf %71, %18 : vector<8x32xf32>
    %87 = arith.addf %85, %86 : vector<8x32xf32>
    %88 = math.tanh %87 : vector<8x32xf32>
    %cst_35 = arith.constant 1.000000e+00 : f32
    %89 = vector.broadcast %cst_35 : f32 to vector<8x32xf32>
    %90 = arith.subf %89, %82 : vector<8x32xf32>
    %91 = arith.mulf %90, %88 : vector<8x32xf32>
    %92 = arith.mulf %82, %0 : vector<8x32xf32>
    %93 = arith.addf %91, %92 : vector<8x32xf32>
    %94 = arith.truncf %93 : vector<8x32xf32> to vector<8x32xbf16>
    %c0_36 = arith.constant 0 : index
    %c0_37 = arith.constant 0 : index
    %95 = vector.load %arg9[%c0_36, %c0_37] : memref<32x4xbf16, #tpu.memory_space<vmem>>, vector<32x4xbf16>
    %cst_38 = arith.constant dense<0.000000e+00> : vector<8x4xf32>
    %96 = tpu.matmul %94, %95, %cst_38 {dimension_numbers = #tpu.dot_dimension_numbers<[1], [0], [0], [1], [0, 0, 1, 1], [], []>} : vector<8x32xbf16>, vector<32x4xbf16>, vector<8x4xf32> -> vector<8x4xf32>
    %c0_39 = arith.constant 0 : index
    %c0_40 = arith.constant 0 : index
    %97 = vector.load %arg10[%c0_39, %c0_40] : memref<1x4xf32, #tpu.memory_space<vmem>>, vector<1x4xf32>
    %98 = vector.broadcast %97 : vector<1x4xf32> to vector<8x4xf32>
    %99 = arith.addf %96, %98 : vector<8x4xf32>
    %100 = tpu.concatenate %60, %99 in 1 : vector<8x4xf32>, vector<8x4xf32> -> vector<8x8xf32>
    %c0_41 = arith.constant 0 : index
    %c0_42 = arith.constant 0 : index
    %101 = vector.load %arg11[%c0_41, %c0_42] : memref<8x8xf32, #tpu.memory_space<vmem>>, vector<8x8xf32>
    tpu.vector_store %arg11[%c0_41, %c0_42], %100 {strides = array<i32>} : memref<8x8xf32, #tpu.memory_space<vmem>>, vector<8x8xf32>,
    return
  }
  func.func @transform_0(%arg0: i32) -> (i32, i32) {
    %c0_i32 = arith.constant 0 : i32
    %c0_i32_0 = arith.constant 0 : i32
    return %arg0, %c0_i32 : i32, i32
  }
  func.func @transform_1(%arg0: i32) -> (i32, i32) {
    %c0_i32 = arith.constant 0 : i32
    %c0_i32_0 = arith.constant 0 : i32
    %c0_i32_1 = arith.constant 0 : i32
    return %c0_i32, %c0_i32_0 : i32, i32
  }
  func.func @transform_2(%arg0: i32) -> (i32, i32) {
    %c0_i32 = arith.constant 0 : i32
    %c0_i32_0 = arith.constant 0 : i32
    return %arg0, %c0_i32 : i32, i32
  }
  func.func @transform_3(%arg0: i32) -> (i32, i32) {
    %c0_i32 = arith.constant 0 : i32
    %c0_i32_0 = arith.constant 0 : i32
    %c0_i32_1 = arith.constant 0 : i32
    return %c0_i32, %c0_i32_0 : i32, i32
  }
  func.func @transform_4(%arg0: i32) -> (i32, i32) {
    %c0_i32 = arith.constant 0 : i32
    %c0_i32_0 = arith.constant 0 : i32
    %c0_i32_1 = arith.constant 0 : i32
    return %c0_i32, %c0_i32_0 : i32, i32
  }
  func.func @transform_5(%arg0: i32) -> (i32, i32) {
    %c0_i32 = arith.constant 0 : i32
    %c0_i32_0 = arith.constant 0 : i32
    %c0_i32_1 = arith.constant 0 : i32
    return %c0_i32, %c0_i32_0 : i32, i32
  }
  func.func @transform_6(%arg0: i32) -> (i32, i32) {
    %c0_i32 = arith.constant 0 : i32
    %c0_i32_0 = arith.constant 0 : i32
    %c0_i32_1 = arith.constant 0 : i32
    return %c0_i32, %c0_i32_0 : i32, i32
  }
  func.func @transform_7(%arg0: i32) -> (i32, i32) {
    %c0_i32 = arith.constant 0 : i32
    %c0_i32_0 = arith.constant 0 : i32
    %c0_i32_1 = arith.constant 0 : i32
    return %c0_i32, %c0_i32_0 : i32, i32
  }
  func.func @transform_8(%arg0: i32) -> (i32, i32) {
    %c0_i32 = arith.constant 0 : i32
    %c0_i32_0 = arith.constant 0 : i32
    %c0_i32_1 = arith.constant 0 : i32
    return %c0_i32, %c0_i32_0 : i32, i32
  }
  func.func @transform_9(%arg0: i32) -> (i32, i32) {
    %c0_i32 = arith.constant 0 : i32
    %c0_i32_0 = arith.constant 0 : i32
    %c0_i32_1 = arith.constant 0 : i32
    return %c0_i32, %c0_i32_0 : i32, i32
  }
  func.func @transform_10(%arg0: i32) -> (i32, i32) {
    %c0_i32 = arith.constant 0 : i32
    %c0_i32_0 = arith.constant 0 : i32
    return %arg0, %c0_i32 : i32, i32
  }
}

</mosaic_0001>

<llo_original>
// kernel: rec_enc_forward.2
$region0: #{rec_enc_forward.2}
  #allocation0 [shape = 'u32[]', space=smem, size = 0x4, offset = 0x4, fixed_abs, tag = 'smem constant byte address 0x4 - core index']
  #allocation1 [shape = 'u32[144,128]{1,0:T(1,128)}', space=vmem, size = 0x12000, scoped, tag = 'internal scratch']
  #allocation2 [shape = 'f32[8,32]{1,0:T(8,128)}', space=vmem, size = 0x1000, scoped, tag = 'scratch operand']
  %s0 = inlined_call_operand.vmem [shape: bf16[4,8,4], index: 0, kind: input, shape index: {}]
  %s1 = inlined_call_operand.vmem [shape: bf16[4,32], index: 1, kind: input, shape index: {}]
  %s2 = inlined_call_operand.vmem [shape: f32[1,32], index: 2, kind: input, shape index: {}]
  %s3 = inlined_call_operand.vmem [shape: bf16[32,96], index: 3, kind: input, shape index: {}]
  %s4 = inlined_call_operand.vmem [shape: f32[1,96], index: 4, kind: input, shape index: {}]
  %s5 = inlined_call_operand.vmem [shape: bf16[32,96], index: 5, kind: input, shape index: {}]
  %s6 = inlined_call_operand.vmem [shape: f32[1,32], index: 6, kind: input, shape index: {}]
  %s7 = inlined_call_operand.vmem [shape: f32[8,32], index: 7, kind: output, shape index: {}]
  %s8 = sld [smem:[#allocation0]]
  $region69: #{rec_enc_forward.2} parent=0
    _
  %s10 = ssub.s32 1, %s8
  %s11 = scalar_select 0, %s10, %s8
  loop: start=0, step=1, limit=6
  $region2: #{rec_enc_forward.2} parent=0 // loop_pre_header
    _
  $region3: #{rec_enc_forward.2} parent=0 // loop_header
    %s13 = sphi 0, %s17
    %p14 = scmp.ge.s32.totalorder %s13, 6
    %s20 = sphi 0, %s32
    %s21 = sphi 0, %s28
    %s22 = sphi 0, %s20
    %s23 = sphi 0, %s21
    %s24 = sphi 0, %s22
    %s25 = sphi 0, %s23
    %s37 = sphi 0, %s39
    %s40 = sphi 0, %s37
    %s41 = sphi 0, %s40
    %s57 = sphi 0, %s41
    %s61 = sphi 0, %s61
    %s63 = sphi 0, %s61
    %s64 = sphi 0, %s63
    %s78 = sphi 0, %s64
    %s82 = sphi 0, %s82
    %s84 = sphi 0, %s82
    %s85 = sphi 0, %s84
    %s99 = sphi 0, %s85
    %s103 = sphi 0, %s103
    %s105 = sphi 0, %s103
    %s106 = sphi 0, %s105
    %s120 = sphi 0, %s106
    %s124 = sphi 0, %s124
    %s126 = sphi 0, %s124
    %s127 = sphi 0, %s126
    %s141 = sphi 0, %s127
    %s145 = sphi 0, %s145
    %s147 = sphi 0, %s145
    %s148 = sphi 0, %s147
    %s162 = sphi 0, %s148
    %s166 = sphi 0, %s166
    %s168 = sphi 0, %s166
    %s169 = sphi 0, %s168
    %s183 = sphi 0, %s169
    %s189 = sphi 0, %s191
    %s192 = sphi 0, %s189
    %s193 = sphi 0, %s192
    %s209 = sphi 0, %s193
  $region4: #{rec_enc_forward.2} parent=0 // loop_header_branch
    %16 = sbr.rel (%p14) target = $region8
  $region5: #{rec_enc_forward.2} parent=0 // loop_body
    %s18 = ssub.s32 %s13, 1
    %s19 = ssub.s32 %s13, 2
    %s26 = sadd.s32 1, %s21
    %p27 = scmp.ge.s32.totalorder %s26, 4
    %s28 = scalar_select %p27, 0, %s26
    %s29 = sadd.s32 1, %s20
    %s30 = scalar_select %p27, %s29, %s20
    %p31 = scmp.ge.s32.totalorder %s30, 1
    %s32 = scalar_select %p31, 0, %s30
    %s33 = ssub.s32 %s21, %s28
    %s34 = ssub.s32 %s20, %s32
    %s35 = sor.u32 %s33, %s34
    %p36 = scmp.eq.s32.totalorder %s35, 0
    %s38 = sadd.s32 %s37, 1
    %s39 = scalar_select %p36, %s37, %s38
    %p42 = pneg %p36
    %p43 = scmp.eq.s32.totalorder %s13, 3
    %p44 = por %p42, %p43
    %p45 = scmp.ne.s32.totalorder %s37, %s40
    %p46 = scmp.eq.s32.totalorder %s13, 0
    %p47 = por %p45, %p46
    %p48 = scmp.ne.s32.totalorder %s37, %s40
    %p49 = scmp.eq.s32.totalorder %s18, 3
    %p50 = por %p48, %p49
    %p51 = scmp.ne.s32.totalorder %s40, %s41
    %p52 = scmp.eq.s32.totalorder %s18, 0
    %p53 = por %p51, %p52
    %p54 = scmp.ne.s32.totalorder %s40, %s41
    %p55 = scmp.eq.s32.totalorder %s19, 3
    %p56 = por %p54, %p55
    %p58 = scmp.ne.s32.totalorder %s41, %s57
    %p59 = scmp.eq.s32.totalorder %s19, 0
    %p60 = por %p58, %p59
    %s62 = sadd.s32 %s61, 1
    %p65 = scmp.eq.s32.totalorder %s13, 3
    %p66 = scmp.ne.s32.totalorder %s61, %s63
    %p67 = scmp.eq.s32.totalorder %s13, 0
    %p68 = por %p66, %p67
    %p69 = scmp.ne.s32.totalorder %s61, %s63
    %p70 = scmp.eq.s32.totalorder %s18, 3
    %p71 = por %p69, %p70
    %p72 = scmp.ne.s32.totalorder %s63, %s64
    %p73 = scmp.eq.s32.totalorder %s18, 0
    %p74 = por %p72, %p73
    %p75 = scmp.ne.s32.totalorder %s63, %s64
    %p76 = scmp.eq.s32.totalorder %s19, 3
    %p77 = por %p75, %p76
    %p79 = scmp.ne.s32.totalorder %s64, %s78
    %p80 = scmp.eq.s32.totalorder %s19, 0
    %p81 = por %p79, %p80
    %s83 = sadd.s32 %s82, 1
    %p86 = scmp.eq.s32.totalorder %s13, 3
    %p87 = scmp.ne.s32.totalorder %s82, %s84
    %p88 = scmp.eq.s32.totalorder %s13, 0
    %p89 = por %p87, %p88
    %p90 = scmp.ne.s32.totalorder %s82, %s84
    %p91 = scmp.eq.s32.totalorder %s18, 3
    %p92 = por %p90, %p91
    %p93 = scmp.ne.s32.totalorder %s84, %s85
    %p94 = scmp.eq.s32.totalorder %s18, 0
    %p95 = por %p93, %p94
    %p96 = scmp.ne.s32.totalorder %s84, %s85
    %p97 = scmp.eq.s32.totalorder %s19, 3
    %p98 = por %p96, %p97
    %p100 = scmp.ne.s32.totalorder %s85, %s99
    %p101 = scmp.eq.s32.totalorder %s19, 0
    %p102 = por %p100, %p101
    %s104 = sadd.s32 %s103, 1
    %p107 = scmp.eq.s32.totalorder %s13, 3
    %p108 = scmp.ne.s32.totalorder %s103, %s105
    %p109 = scmp.eq.s32.totalorder %s13, 0
    %p110 = por %p108, %p109
    %p111 = scmp.ne.s32.totalorder %s103, %s105
    %p112 = scmp.eq.s32.totalorder %s18, 3
    %p113 = por %p111, %p112
    %p114 = scmp.ne.s32.totalorder %s105, %s106
    %p115 = scmp.eq.s32.totalorder %s18, 0
    %p116 = por %p114, %p115
    %p117 = scmp.ne.s32.totalorder %s105, %s106
    %p118 = scmp.eq.s32.totalorder %s19, 3
    %p119 = por %p117, %p118
    %p121 = scmp.ne.s32.totalorder %s106, %s120
    %p122 = scmp.eq.s32.totalorder %s19, 0
    %p123 = por %p121, %p122
    %s125 = sadd.s32 %s124, 1
    %p128 = scmp.eq.s32.totalorder %s13, 3
    %p129 = scmp.ne.s32.totalorder %s124, %s126
    %p130 = scmp.eq.s32.totalorder %s13, 0
    %p131 = por %p129, %p130
    %p132 = scmp.ne.s32.totalorder %s124, %s126
    %p133 = scmp.eq.s32.totalorder %s18, 3
    %p134 = por %p132, %p133
    %p135 = scmp.ne.s32.totalorder %s126, %s127
    %p136 = scmp.eq.s32.totalorder %s18, 0
    %p137 = por %p135, %p136
    %p138 = scmp.ne.s32.totalorder %s126, %s127
    %p139 = scmp.eq.s32.totalorder %s19, 3
    %p140 = por %p138, %p139
    %p142 = scmp.ne.s32.totalorder %s127, %s141
    %p143 = scmp.eq.s32.totalorder %s19, 0
    %p144 = por %p142, %p143
    %s146 = sadd.s32 %s145, 1
    %p149 = scmp.eq.s32.totalorder %s13, 3
    %p150 = scmp.ne.s32.totalorder %s145, %s147
    %p151 = scmp.eq.s32.totalorder %s13, 0
    %p152 = por %p150, %p151
    %p153 = scmp.ne.s32.totalorder %s145, %s147
    %p154 = scmp.eq.s32.totalorder %s18, 3
    %p155 = por %p153, %p154
    %p156 = scmp.ne.s32.totalorder %s147, %s148
    %p157 = scmp.eq.s32.totalorder %s18, 0
    %p158 = por %p156, %p157
    %p159 = scmp.ne.s32.totalorder %s147, %s148
    %p160 = scmp.eq.s32.totalorder %s19, 3
    %p161 = por %p159, %p160
    %p163 = scmp.ne.s32.totalorder %s148, %s162
    %p164 = scmp.eq.s32.totalorder %s19, 0
    %p165 = por %p163, %p164
    %s167 = sadd.s32 %s166, 1
    %p170 = scmp.eq.s32.totalorder %s13, 3
    %p171 = scmp.ne.s32.totalorder %s166, %s168
    %p172 = scmp.eq.s32.totalorder %s13, 0
    %p173 = por %p171, %p172
    %p174 = scmp.ne.s32.totalorder %s166, %s168
    %p175 = scmp.eq.s32.totalorder %s18, 3
    %p176 = por %p174, %p175
    %p177 = scmp.ne.s32.totalorder %s168, %s169
    %p178 = scmp.eq.s32.totalorder %s18, 0
    %p179 = por %p177, %p178
    %p180 = scmp.ne.s32.totalorder %s168, %s169
    %p181 = scmp.eq.s32.totalorder %s19, 3
    %p182 = por %p180, %p181
    %p184 = scmp.ne.s32.totalorder %s169, %s183
    %p185 = scmp.eq.s32.totalorder %s19, 0
    %p186 = por %p184, %p185
    %s187 = ssub.s32 %s20, %s32
    %p188 = scmp.eq.s32.totalorder %s187, 0
    %s190 = sadd.s32 %s189, 1
    %s191 = scalar_select %p188, %s189, %s190
    %p194 = pneg %p188
    %p195 = scmp.eq.s32.totalorder %s13, 3
    %p196 = por %p194, %p195
    %p197 = scmp.ne.s32.totalorder %s189, %s192
    %p198 = scmp.eq.s32.totalorder %s13, 0
    %p199 = por %p197, %p198
    %p200 = scmp.ne.s32.totalorder %s189, %s192
    %p201 = scmp.eq.s32.totalorder %s18, 3
    %p202 = por %p200, %p201
    %p203 = scmp.ne.s32.totalorder %s192, %s193
    %p204 = scmp.eq.s32.totalorder %s18, 0
    %p205 = por %p203, %p204
    %p206 = scmp.ne.s32.totalorder %s192, %s193
    %p207 = scmp.eq.s32.totalorder %s19, 3
    %p208 = por %p206, %p207
    %p210 = scmp.ne.s32.totalorder %s193, %s209
    %p211 = scmp.eq.s32.totalorder %s19, 0
    %p212 = por %p210, %p211
    %p213 = scmp.le.s32.totalorder 1, %s13
    %p214 = scmp.lt.s32.totalorder %s13, 5
    %p215 = pnand %p213, %p214
    %p216 = pneg %p215
    // Predicated region
    $region9: #{rec_enc_forward.2} parent=5 // pred_check
      _
    $region10: #{rec_enc_forward.2} parent=5 // pred_check_branch
      %218 = sbr.rel (%p215) target = $region12
    $region11: #{rec_enc_forward.2} parent=5 // pred_region
      %s219 = ssub.s32 %s13, 1
      // Predicated region
      $region13: #{rec_enc_forward.2} parent=11 // pred_check
        %p220 = pneg %p74
      $region14: #{rec_enc_forward.2} parent=11 // pred_check_branch
        %222 = sbr.rel (%p220) target = $region16
      $region15: #{rec_enc_forward.2} parent=11 // pred_region
        _
      $region16: #{rec_enc_forward.2} parent=11 // pred_fallthru
        _
      // Predicated region
      $region17: #{rec_enc_forward.2} parent=11 // pred_check
        %p223 = pneg %p95
      $region18: #{rec_enc_forward.2} parent=11 // pred_check_branch
        %225 = sbr.rel (%p223) target = $region20
      $region19: #{rec_enc_forward.2} parent=11 // pred_region
        _
      $region20: #{rec_enc_forward.2} parent=11 // pred_fallthru
        _
      // Predicated region
      $region21: #{rec_enc_forward.2} parent=11 // pred_check
        %p226 = pneg %p116
      $region22: #{rec_enc_forward.2} parent=11 // pred_check_branch
        %228 = sbr.rel (%p226) target = $region24
      $region23: #{rec_enc_forward.2} parent=11 // pred_region
        _
      $region24: #{rec_enc_forward.2} parent=11 // pred_fallthru
        _
      // Predicated region
      $region25: #{rec_enc_forward.2} parent=11 // pred_check
        %p229 = pneg %p137
      $region26: #{rec_enc_forward.2} parent=11 // pred_check_branch
        %231 = sbr.rel (%p229) target = $region28
      $region27: #{rec_enc_forward.2} parent=11 // pred_region
        _
      $region28: #{rec_enc_forward.2} parent=11 // pred_fallthru
        _
      // Predicated region
      $region29: #{rec_enc_forward.2} parent=11 // pred_check
        %p232 = pneg %p158
      $region30: #{rec_enc_forward.2} parent=11 // pred_check_branch
        %234 = sbr.rel (%p232) target = $region32
      $region31: #{rec_enc_forward.2} parent=11 // pred_region
        _
      $region32: #{rec_enc_forward.2} parent=11 // pred_fallthru
        _
      // Predicated region
      $region33: #{rec_enc_forward.2} parent=11 // pred_check
        %p235 = pneg %p179
      $region34: #{rec_enc_forward.2} parent=11 // pred_check_branch
        %237 = sbr.rel (%p235) target = $region36
      $region35: #{rec_enc_forward.2} parent=11 // pred_region
        _
      $region36: #{rec_enc_forward.2} parent=11 // pred_fallthru
        _
    $region12: #{rec_enc_forward.2} parent=5 // pred_fallthru
      _
    %p238 = scmp.lt.s32.totalorder %s13, 4
    // Predicated region
    $region37: #{rec_enc_forward.2} parent=5 // pred_check
      %p239 = pneg %p238
    $region38: #{rec_enc_forward.2} parent=5 // pred_check_branch
      %241 = sbr.rel (%p239) target = $region40
    $region39: #{rec_enc_forward.2} parent=5 // pred_region
      // Predicated region
      $region41: #{rec_enc_forward.2} parent=39 // pred_check
        %p242 = pneg %p47
      $region42: #{rec_enc_forward.2} parent=39 // pred_check_branch
        %244 = sbr.rel (%p242) target = $region44
      $region43: #{rec_enc_forward.2} parent=39 // pred_region
        %p245 = scmp.lt.s32.totalorder %s21, 3
        %s246 = scalar_select %p245, %s21, 3
        %p247 = scmp.lt.s32.totalorder %s20, 0
        %s248 = scalar_select %p247, %s20, 0
        %s249 = sadd.s32 %s248, %s246
        %s250 = smul.addr %s249, 4
        %s251 = scalar_lea.vmem %s0, %s250
      $region44: #{rec_enc_forward.2} parent=39 // pred_fallthru
        _
    $region40: #{rec_enc_forward.2} parent=5 // pred_fallthru
      _
    %p252 = scmp.le.s32.totalorder 1, %s13
    %p253 = scmp.lt.s32.totalorder %s13, 5
    %p254 = pnand %p252, %p253
    %p255 = pneg %p254
    // Predicated region
    $region45: #{rec_enc_forward.2} parent=5 // pred_check
      _
    $region46: #{rec_enc_forward.2} parent=5 // pred_check_branch
      %257 = sbr.rel (%p254) target = $region48
    $region47: #{rec_enc_forward.2} parent=5 // pred_region
      %s258 = ssub.s32 %s13, 1
      %p259 = scmp.lt.s32.totalorder %s23, 3
      %s260 = scalar_select %p259, %s23, 3
      %p261 = scmp.lt.s32.totalorder %s22, 0
      %s262 = scalar_select %p261, %s22, 0
      %s263 = sadd.s32 %s262, %s260
      %s264 = smul.addr %s263, 4
      %s265 = scalar_lea.vmem %s0, %s264
      %p266 = pneg %p53
      %p267 = pneg %p50
      %p268 = pneg %p74
      %p269 = pneg %p71
      %p270 = pneg %p95
      %p271 = pneg %p92
      %p272 = pneg %p116
      %p273 = pneg %p113
      %p274 = pneg %p137
      %p275 = pneg %p134
      %p276 = pneg %p158
      %p277 = pneg %p155
      %p278 = pneg %p179
      %p279 = pneg %p176
      %p280 = pneg %p205
      %p281 = pneg %p202
      %p282 = scmp.lt.s32.totalorder %s22, 0
      %s283 = scalar_select %p282, %s22, 0
      %s284 = smul.addr %s283, 8
      %s285 = scalar_lea.vmem %s7, %s284
      %p286 = scmp.lt.s32.totalorder %s23, 3
      %s287 = scalar_select %p286, %s23, 3
      %p288 = scmp.lt.s32.totalorder %s22, 0
      %s289 = scalar_select %p288, %s22, 0
      %s290 = sadd.s32 %s289, %s287
      %s291 = smul.addr %s290, 4
      %s292 = scalar_lea.vmem %s0, %s291
      %p293 = scmp.lt.s32.totalorder %s22, 0
      %s294 = scalar_select %p293, %s22, 0
      %s295 = smul.addr %s294, 8
      %s296 = scalar_lea.vmem %s7, %s295
      %p298 = scmp.eq.s32.totalorder %s23, 0
      // Predicated region
      $region49: #{rec_enc_forward.2} parent=47 // pred_check
        %p299 = pneg %p298
      $region50: #{rec_enc_forward.2} parent=47 // pred_check_branch
        %301 = sbr.rel (%p299) target = $region52
      $region51: #{rec_enc_forward.2} parent=47 // pred_region
        %vm302 = vcmask 261120
        %303 = vst.msk [vmem:[#allocation2] sm:$0xff] %vm302, 0.0
      $region52: #{rec_enc_forward.2} parent=47 // pred_fallthru
        _
      %v304 = vld [vmem:[%s292] sm:$0xf]
      %v305 = vld [vmem:[%s1] sm:$0x3]
      %v306 = vld [vmem:[%s2] sm:$0x1]
      %v308 = vlaneseq
      %v309 = vshrl.u32 %v308, 7
      %v310 = vsub.s32 0, %v309
      %v311 = vrot.slane %v306, %v310
      %vm313 = vcmask 31744
      %v315 = vsel %vm313, %v304, 0
      %vm317 = vcmask 1041408
      %v319 = vsel %vm317, %v305, 0
      %321 = vmatprep.subr.bf16.mxu0 0
      %322 = vmatpush1.bf16.msra.mxu0 0
      %323 = vmatprep.subr.bf16.mxu0 0
      %324 = vmatpush1.bf16.msra.mxu0 0
      %325 = vmatprep.subr.bf16.mxu0 0
      %326 = vmatpush1.bf16.msra.mxu0 0
      %327 = vmatprep.subr.bf16.mxu0 0
      %328 = vmatpush1.bf16.msra.mxu0 0
      %329 = vmatprep.subr.bf16.mxu0 0
      %330 = vmatpush1.bf16.msra.mxu0 0
      %331 = vmatprep.subr.bf16.mxu0 0
      %332 = vmatpush1.bf16.msra.mxu0 0
      %333 = vmatprep.subr.bf16.mxu0 0
      %334 = vmatpush1.bf16.msra.mxu0 0
      %335 = vmatprep.subr.bf16.mxu0 0
      %336 = vmatpush1.bf16.msra.mxu0 %v319
      %337 = vmatprep.subr.bf16.mxu0 0
      %338 = vmatpush2.bf16.msra.mxu0 0
      %339 = vmatprep.subr.bf16.mxu0 0
      %340 = vmatpush2.bf16.msra.mxu0 0
      %341 = vmatprep.subr.bf16.mxu0 0
      %342 = vmatpush2.bf16.msra.mxu0 0
      %343 = vmatprep.subr.bf16.mxu0 0
      %344 = vmatpush2.bf16.msra.mxu0 0
      %345 = vmatprep.subr.bf16.mxu0 0
      %346 = vmatpush2.bf16.msra.mxu0 0
      %347 = vmatprep.subr.bf16.mxu0 0
      %348 = vmatpush2.bf16.msra.mxu0 0
      %349 = vmatprep.subr.bf16.mxu0 0
      %350 = vmatpush2.bf16.msra.mxu0 0
      %351 = vmatprep.subr.bf16.mxu0 0
      %352 = vmatpush2.bf16.msra.mxu0 0
      %353 = vmatprep.mubr.bf16.mxu0 0
      %354 = vmatmul.mubr.bf16.gmra.mxu0 %v315
      %v355 = vpop.f32.mrf.mxu0
      %v356 = vadd.f32 %v311, %v355
      %v357 = vpop.f32.mrf.mxu0
      %v358 = vpop.f32.mrf.mxu0
      %v359 = vpop.f32.mrf.mxu0
      %360 = vdwg.mxu0
      %v361 = vmax.f32 %v356, 0.0
      %v362 = vpack.c.bf16 %v361, %v361
      %v363 = vld [vmem:[%s3] sm:$0xf]
      %v364 = vld [vmem:[%s3 + $0x4] sm:$0xf]
      %v365 = vld [vmem:[%s3 + $0x8] sm:$0xf]
      %v366 = vld [vmem:[%s3 + $0xc] sm:$0xf]
      %v367 = vld [vmem:[%s4] sm:$0x1]
      %v369 = vlaneseq
      %v370 = vshrl.u32 %v369, 7
      %v371 = vsub.s32 0, %v370
      %v372 = vrot.slane %v367, %v371
      %v378 = vunpack.c.l.b16 %v363
      %v379 = vunpack.c.l.b16 %v364
      %v380 = vunpack.c.l.b16 %v365
      %v381 = vunpack.c.l.b16 %v366
      %v382 = vpack.c.b16 %v379, %v378
      %v383 = vpack.c.b16 %v381, %v380
      %vm386 = vcmask 261120
      %v388 = vsel %vm386, %v362, 0
      %390 = vmatprep.subr.bf16.mxu0 0
      %391 = vmatpush1.bf16.msra.mxu0 0
      %392 = vmatprep.subr.bf16.mxu0 0
      %393 = vmatpush1.bf16.msra.mxu0 0
      %394 = vmatprep.subr.bf16.mxu0 0
      %395 = vmatpush1.bf16.msra.mxu0 0
      %396 = vmatprep.subr.bf16.mxu0 0
      %397 = vmatpush1.bf16.msra.mxu0 0
      %398 = vmatprep.subr.bf16.mxu0 0
      %399 = vmatpush1.bf16.msra.mxu0 0
      %400 = vmatprep.subr.bf16.mxu0 0
      %401 = vmatpush1.bf16.msra.mxu0 0
      %402 = vmatprep.subr.bf16.mxu0 0
      %403 = vmatpush1.bf16.msra.mxu0 %v383
      %404 = vmatprep.subr.bf16.mxu0 0
      %405 = vmatpush1.bf16.msra.mxu0 %v382
      %406 = vmatprep.subr.bf16.mxu0 0
      %407 = vmatpush2.bf16.msra.mxu0 0
      %408 = vmatprep.subr.bf16.mxu0 0
      %409 = vmatpush2.bf16.msra.mxu0 0
      %410 = vmatprep.subr.bf16.mxu0 0
      %411 = vmatpush2.bf16.msra.mxu0 0
      %412 = vmatprep.subr.bf16.mxu0 0
      %413 = vmatpush2.bf16.msra.mxu0 0
      %414 = vmatprep.subr.bf16.mxu0 0
      %415 = vmatpush2.bf16.msra.mxu0 0
      %416 = vmatprep.subr.bf16.mxu0 0
      %417 = vmatpush2.bf16.msra.mxu0 0
      %418 = vmatprep.subr.bf16.mxu0 0
      %419 = vmatpush2.bf16.msra.mxu0 0
      %420 = vmatprep.subr.bf16.mxu0 0
      %421 = vmatpush2.bf16.msra.mxu0 0
      %422 = vmatprep.mubr.bf16.mxu0 0
      %423 = vmatmul.mubr.bf16.gmra.mxu0 %v388
      %v424 = vpop.f32.mrf.mxu0
      %v425 = vadd.f32 %v372, %v424
      %v426 = vpop.f32.mrf.mxu0
      %v427 = vpop.f32.mrf.mxu0
      %v428 = vpop.f32.mrf.mxu0
      %429 = vdwg.mxu0
      %v430 = vld [vmem:[#allocation2] sm:$0xff]
      %v431 = vpack.c.bf16 %v430, %v430
      %v432 = vld [vmem:[%s5] sm:$0xf]
      %v433 = vld [vmem:[%s5 + $0x4] sm:$0xf]
      %v434 = vld [vmem:[%s5 + $0x8] sm:$0xf]
      %v435 = vld [vmem:[%s5 + $0xc] sm:$0xf]
      %v440 = vunpack.c.l.b16 %v432
      %v441 = vunpack.c.l.b16 %v433
      %v442 = vunpack.c.l.b16 %v434
      %v443 = vunpack.c.l.b16 %v435
      %v444 = vpack.c.b16 %v441, %v440
      %v445 = vpack.c.b16 %v443, %v442
      %v449 = vsel %vm386, %v431, 0
      %451 = vmatprep.subr.bf16.mxu0 0
      %452 = vmatpush1.bf16.msra.mxu0 0
      %453 = vmatprep.subr.bf16.mxu0 0
      %454 = vmatpush1.bf16.msra.mxu0 0
      %455 = vmatprep.subr.bf16.mxu0 0
      %456 = vmatpush1.bf16.msra.mxu0 0
      %457 = vmatprep.subr.bf16.mxu0 0
      %458 = vmatpush1.bf16.msra.mxu0 0
      %459 = vmatprep.subr.bf16.mxu0 0
      %460 = vmatpush1.bf16.msra.mxu0 0
      %461 = vmatprep.subr.bf16.mxu0 0
      %462 = vmatpush1.bf16.msra.mxu0 0
      %463 = vmatprep.subr.bf16.mxu0 0
      %464 = vmatpush1.bf16.msra.mxu0 %v445
      %465 = vmatprep.subr.bf16.mxu0 0
      %466 = vmatpush1.bf16.msra.mxu0 %v444
      %467 = vmatprep.subr.bf16.mxu0 0
      %468 = vmatpush2.bf16.msra.mxu0 0
      %469 = vmatprep.subr.bf16.mxu0 0
      %470 = vmatpush2.bf16.msra.mxu0 0
      %471 = vmatprep.subr.bf16.mxu0 0
      %472 = vmatpush2.bf16.msra.mxu0 0
      %473 = vmatprep.subr.bf16.mxu0 0
      %474 = vmatpush2.bf16.msra.mxu0 0
      %475 = vmatprep.subr.bf16.mxu0 0
      %476 = vmatpush2.bf16.msra.mxu0 0
      %477 = vmatprep.subr.bf16.mxu0 0
      %478 = vmatpush2.bf16.msra.mxu0 0
      %479 = vmatprep.subr.bf16.mxu0 0
      %480 = vmatpush2.bf16.msra.mxu0 0
      %481 = vmatprep.subr.bf16.mxu0 0
      %482 = vmatpush2.bf16.msra.mxu0 0
      %483 = vmatprep.mubr.bf16.mxu0 0
      %484 = vmatmul.mubr.bf16.gmra.mxu0 %v449
      %v485 = vpop.f32.mrf.mxu0
      %v486 = vadd.f32 0.0, %v485
      %v487 = vpop.f32.mrf.mxu0
      %v488 = vpop.f32.mrf.mxu0
      %v489 = vpop.f32.mrf.mxu0
      %490 = vdwg.mxu0
      %v491 = vadd.f32 %v425, %v486
      %v492 = vmul.f32 %v491, 0.5
      %v493 = vtanh.pop %v492
      %v494 = vadd.f32 %v493, 1.0
      %v495 = vmul.f32 %v494, 0.5
      %v496 = vld [vmem:[%s6] sm:$0x1]
      %v498 = vlaneseq
      %v499 = vshrl.u32 %v498, 7
      %v500 = vsub.s32 0, %v499
      %v501 = vrot.slane %v496, %v500
      %502 = vrot.lane.b32.xlu0 %v501, 64
      %v503 = vpop.permute.xlu0 %502
      %v505 = vadd.f32 %v486, %v503
      %507 = vrot.lane.b32.xlu0 %v505, 64
      %v508 = vpop.permute.xlu0 %507
      %v510 = vmul.f32 %v495, %v508
      %512 = vrot.lane.b32.xlu0 %v510, 64
      %v513 = vpop.permute.xlu0 %512
      %v515 = vadd.f32 %v425, %v513
      %v516 = vtanh.pop %v515
      %v517 = vsub.f32 1.0, %v495
      %519 = vrot.lane.b32.xlu0 %v516, 96
      %v520 = vpop.permute.xlu0 %519
      %v522 = vmul.f32 %v517, %v520
      %524 = vrot.lane.b32.xlu0 %v430, 32
      %v525 = vpop.permute.xlu0 %524
      %v527 = vmul.f32 %v495, %v525
      %v528 = vadd.f32 %v522, %v527
      %530 = vrot.lane.b32.xlu0 %v528, 96
      %v531 = vpop.permute.xlu0 %530
      %533 = vst.msk [vmem:[#allocation2] sm:$0xff] %vm386, %v531
      %p534 = scmp.eq.s32.totalorder %s23, 3
      // Predicated region
      $region53: #{rec_enc_forward.2} parent=47 // pred_check
        %p535 = pneg %p534
      $region54: #{rec_enc_forward.2} parent=47 // pred_check_branch
        %537 = sbr.rel (%p535) target = $region56
      $region55: #{rec_enc_forward.2} parent=47 // pred_region
        %538 = vst.msk [vmem:[%s296] sm:$0xff] %vm386, %v531
      $region56: #{rec_enc_forward.2} parent=47 // pred_fallthru
        _
      %p539 = scmp.lt.s32.totalorder %s22, 0
      %s540 = scalar_select %p539, %s22, 0
      %s541 = smul.addr %s540, 8
      %s542 = scalar_lea.vmem %s7, %s541
      // Predicated region
      $region57: #{rec_enc_forward.2} parent=47 // pred_check
        %p543 = pneg %p202
      $region58: #{rec_enc_forward.2} parent=47 // pred_check_branch
        %545 = sbr.rel (%p543) target = $region60
      $region59: #{rec_enc_forward.2} parent=47 // pred_region
        _
      $region60: #{rec_enc_forward.2} parent=47 // pred_fallthru
        _
      // Predicated region
      $region61: #{rec_enc_forward.2} parent=47 // pred_check
        %p546 = pneg %p202
      $region62: #{rec_enc_forward.2} parent=47 // pred_check_branch
        %548 = sbr.rel (%p546) target = $region64
      $region63: #{rec_enc_forward.2} parent=47 // pred_region
        %p549 = scmp.lt.s32.totalorder %s22, 0
        %s550 = scalar_select %p549, %s22, 0
        %s551 = smul.addr %s550, 8
        %s552 = scalar_lea.vmem %s7, %s551
      $region64: #{rec_enc_forward.2} parent=47 // pred_fallthru
        _
    $region48: #{rec_enc_forward.2} parent=5 // pred_fallthru
      _
    %p553 = scmp.le.s32.totalorder 2, %s13
    // Predicated region
    $region65: #{rec_enc_forward.2} parent=5 // pred_check
      %p554 = pneg %p553
    $region66: #{rec_enc_forward.2} parent=5 // pred_check_branch
      %556 = sbr.rel (%p554) target = $region68
    $region67: #{rec_enc_forward.2} parent=5 // pred_region
      %s557 = ssub.s32 %s13, 2
    $region68: #{rec_enc_forward.2} parent=5 // pred_fallthru
      _
  $region6: #{rec_enc_forward.2} parent=0 // loop_footer
    %s17 = sadd.s32 1, %s13
  $region7: #{rec_enc_forward.2} parent=0 // loop_footer_branch
    %12 = sbr.rel target = $region3
  $region8: #{rec_enc_forward.2} parent=0 // loop_exit
    _

// kernel: rec_enc_forward.3
$region0: #{rec_enc_forward.3}
  #allocation0 [shape = 'u32[]', space=smem, size = 0x4, offset = 0x4, fixed_abs, tag = 'smem constant byte address 0x4 - core index']
  #allocation1 [shape = 'u32[144,128]{1,0:T(1,128)}', space=vmem, size = 0x12000, scoped, tag = 'internal scratch']
  %s0 = inlined_call_operand.vmem [shape: f32[8,32], index: 0, kind: input, shape index: {}]
  %s1 = inlined_call_operand.vmem [shape: bf16[2,16], index: 1, kind: input, shape index: {}]
  %s2 = inlined_call_operand.vmem [shape: bf16[8,16], index: 2, kind: input, shape index: {}]
  %s3 = inlined_call_operand.vmem [shape: bf16[16,96], index: 3, kind: input, shape index: {}]
  %s4 = inlined_call_operand.vmem [shape: bf16[16,96], index: 4, kind: input, shape index: {}]
  %s5 = inlined_call_operand.vmem [shape: f32[1,96], index: 5, kind: input, shape index: {}]
  %s6 = inlined_call_operand.vmem [shape: bf16[32,96], index: 6, kind: input, shape index: {}]
  %s7 = inlined_call_operand.vmem [shape: f32[1,32], index: 7, kind: input, shape index: {}]
  %s8 = inlined_call_operand.vmem [shape: bf16[32,4], index: 8, kind: input, shape index: {}]
  %s9 = inlined_call_operand.vmem [shape: f32[1,4], index: 9, kind: input, shape index: {}]
  %s10 = inlined_call_operand.vmem [shape: f32[8,8], index: 10, kind: output, shape index: {}]
  %s11 = sld [smem:[#allocation0]]
  $region50: #{rec_enc_forward.3} parent=0
    _
  %s13 = ssub.s32 1, %s11
  %s14 = scalar_select 0, %s13, %s11
  // Predicated region
  $region2: #{rec_enc_forward.3} parent=0 // pred_check
    _
  $region3: #{rec_enc_forward.3} parent=0 // pred_check_branch
    %16 = sbr.rel (0) target = $region5
  $region4: #{rec_enc_forward.3} parent=0 // pred_region
    _
  $region5: #{rec_enc_forward.3} parent=0 // pred_fallthru
    _
  // Predicated region
  $region6: #{rec_enc_forward.3} parent=0 // pred_check
    _
  $region7: #{rec_enc_forward.3} parent=0 // pred_check_branch
    %18 = sbr.rel (0) target = $region9
  $region8: #{rec_enc_forward.3} parent=0 // pred_region
    _
  $region9: #{rec_enc_forward.3} parent=0 // pred_fallthru
    _
  // Predicated region
  $region10: #{rec_enc_forward.3} parent=0 // pred_check
    _
  $region11: #{rec_enc_forward.3} parent=0 // pred_check_branch
    %20 = sbr.rel (0) target = $region13
  $region12: #{rec_enc_forward.3} parent=0 // pred_region
    _
  $region13: #{rec_enc_forward.3} parent=0 // pred_fallthru
    _
  // Predicated region
  $region14: #{rec_enc_forward.3} parent=0 // pred_check
    _
  $region15: #{rec_enc_forward.3} parent=0 // pred_check_branch
    %22 = sbr.rel (0) target = $region17
  $region16: #{rec_enc_forward.3} parent=0 // pred_region
    _
  $region17: #{rec_enc_forward.3} parent=0 // pred_fallthru
    _
  // Predicated region
  $region18: #{rec_enc_forward.3} parent=0 // pred_check
    _
  $region19: #{rec_enc_forward.3} parent=0 // pred_check_branch
    %24 = sbr.rel (0) target = $region21
  $region20: #{rec_enc_forward.3} parent=0 // pred_region
    _
  $region21: #{rec_enc_forward.3} parent=0 // pred_fallthru
    _
  // Predicated region
  $region22: #{rec_enc_forward.3} parent=0 // pred_check
    _
  $region23: #{rec_enc_forward.3} parent=0 // pred_check_branch
    %26 = sbr.rel (0) target = $region25
  $region24: #{rec_enc_forward.3} parent=0 // pred_region
    _
  $region25: #{rec_enc_forward.3} parent=0 // pred_fallthru
    _
  // Predicated region
  $region26: #{rec_enc_forward.3} parent=0 // pred_check
    _
  $region27: #{rec_enc_forward.3} parent=0 // pred_check_branch
    %28 = sbr.rel (0) target = $region29
  $region28: #{rec_enc_forward.3} parent=0 // pred_region
    _
  $region29: #{rec_enc_forward.3} parent=0 // pred_fallthru
    _
  // Predicated region
  $region30: #{rec_enc_forward.3} parent=0 // pred_check
    _
  $region31: #{rec_enc_forward.3} parent=0 // pred_check_branch
    %30 = sbr.rel (0) target = $region33
  $region32: #{rec_enc_forward.3} parent=0 // pred_region
    _
  $region33: #{rec_enc_forward.3} parent=0 // pred_fallthru
    _
  // Predicated region
  $region34: #{rec_enc_forward.3} parent=0 // pred_check
    _
  $region35: #{rec_enc_forward.3} parent=0 // pred_check_branch
    %32 = sbr.rel (0) target = $region37
  $region36: #{rec_enc_forward.3} parent=0 // pred_region
    _
  $region37: #{rec_enc_forward.3} parent=0 // pred_fallthru
    _
  // Predicated region
  $region38: #{rec_enc_forward.3} parent=0 // pred_check
    _
  $region39: #{rec_enc_forward.3} parent=0 // pred_check_branch
    %34 = sbr.rel (0) target = $region41
  $region40: #{rec_enc_forward.3} parent=0 // pred_region
    _
  $region41: #{rec_enc_forward.3} parent=0 // pred_fallthru
    _
  %v36 = vld [vmem:[%s0] sm:$0xff]
  %v37 = vpack.c.bf16 %v36, %v36
  %v38 = vld [vmem:[%s6] sm:$0xf]
  %v39 = vld [vmem:[%s6 + $0x4] sm:$0xf]
  %v40 = vld [vmem:[%s6 + $0x8] sm:$0xf]
  %v41 = vld [vmem:[%s6 + $0xc] sm:$0xf]
  %v46 = vunpack.c.l.b16 %v38
  %v47 = vunpack.c.l.b16 %v39
  %v48 = vunpack.c.l.b16 %v40
  %v49 = vunpack.c.l.b16 %v41
  %v50 = vpack.c.b16 %v47, %v46
  %v51 = vpack.c.b16 %v49, %v48
  %vm54 = vcmask 261120
  %v56 = vsel %vm54, %v37, 0
  %58 = vmatprep.subr.bf16.mxu0 0
  %59 = vmatpush1.bf16.msra.mxu0 0
  %60 = vmatprep.subr.bf16.mxu0 0
  %61 = vmatpush1.bf16.msra.mxu0 0
  %62 = vmatprep.subr.bf16.mxu0 0
  %63 = vmatpush1.bf16.msra.mxu0 0
  %64 = vmatprep.subr.bf16.mxu0 0
  %65 = vmatpush1.bf16.msra.mxu0 0
  %66 = vmatprep.subr.bf16.mxu0 0
  %67 = vmatpush1.bf16.msra.mxu0 0
  %68 = vmatprep.subr.bf16.mxu0 0
  %69 = vmatpush1.bf16.msra.mxu0 0
  %70 = vmatprep.subr.bf16.mxu0 0
  %71 = vmatpush1.bf16.msra.mxu0 %v51
  %72 = vmatprep.subr.bf16.mxu0 0
  %73 = vmatpush1.bf16.msra.mxu0 %v50
  %74 = vmatprep.subr.bf16.mxu0 0
  %75 = vmatpush2.bf16.msra.mxu0 0
  %76 = vmatprep.subr.bf16.mxu0 0
  %77 = vmatpush2.bf16.msra.mxu0 0
  %78 = vmatprep.subr.bf16.mxu0 0
  %79 = vmatpush2.bf16.msra.mxu0 0
  %80 = vmatprep.subr.bf16.mxu0 0
  %81 = vmatpush2.bf16.msra.mxu0 0
  %82 = vmatprep.subr.bf16.mxu0 0
  %83 = vmatpush2.bf16.msra.mxu0 0
  %84 = vmatprep.subr.bf16.mxu0 0
  %85 = vmatpush2.bf16.msra.mxu0 0
  %86 = vmatprep.subr.bf16.mxu0 0
  %87 = vmatpush2.bf16.msra.mxu0 0
  %88 = vmatprep.subr.bf16.mxu0 0
  %89 = vmatpush2.bf16.msra.mxu0 0
  %90 = vmatprep.mubr.bf16.mxu0 0
  %91 = vmatmul.mubr.bf16.gmra.mxu0 %v56
  %v92 = vpop.f32.mrf.mxu0
  %v93 = vadd.f32 0.0, %v92
  %v94 = vpop.f32.mrf.mxu0
  %v95 = vpop.f32.mrf.mxu0
  %v96 = vpop.f32.mrf.mxu0
  %97 = vdwg.mxu0
  %v98 = vld [vmem:[%s2] sm:$0xf]
  %v99 = vld [vmem:[%s4] sm:$0xf]
  %v100 = vld [vmem:[%s4 + $0x4] sm:$0xf]
  %v103 = vunpack.c.l.b16 %v99
  %v104 = vunpack.c.l.b16 %v100
  %v105 = vpack.c.b16 %v104, %v103
  %vm107 = vcmask 130048
  %v109 = vsel %vm107, %v98, 0
  %111 = vmatprep.subr.bf16.mxu0 0
  %112 = vmatpush1.bf16.msra.mxu0 0
  %113 = vmatprep.subr.bf16.mxu0 0
  %114 = vmatpush1.bf16.msra.mxu0 0
  %115 = vmatprep.subr.bf16.mxu0 0
  %116 = vmatpush1.bf16.msra.mxu0 0
  %117 = vmatprep.subr.bf16.mxu0 0
  %118 = vmatpush1.bf16.msra.mxu0 0
  %119 = vmatprep.subr.bf16.mxu0 0
  %120 = vmatpush1.bf16.msra.mxu0 0
  %121 = vmatprep.subr.bf16.mxu0 0
  %122 = vmatpush1.bf16.msra.mxu0 0
  %123 = vmatprep.subr.bf16.mxu0 0
  %124 = vmatpush1.bf16.msra.mxu0 0
  %125 = vmatprep.subr.bf16.mxu0 0
  %126 = vmatpush1.bf16.msra.mxu0 %v105
  %127 = vmatprep.subr.bf16.mxu0 0
  %128 = vmatpush2.bf16.msra.mxu0 0
  %129 = vmatprep.subr.bf16.mxu0 0
  %130 = vmatpush2.bf16.msra.mxu0 0
  %131 = vmatprep.subr.bf16.mxu0 0
  %132 = vmatpush2.bf16.msra.mxu0 0
  %133 = vmatprep.subr.bf16.mxu0 0
  %134 = vmatpush2.bf16.msra.mxu0 0
  %135 = vmatprep.subr.bf16.mxu0 0
  %136 = vmatpush2.bf16.msra.mxu0 0
  %137 = vmatprep.subr.bf16.mxu0 0
  %138 = vmatpush2.bf16.msra.mxu0 0
  %139 = vmatprep.subr.bf16.mxu0 0
  %140 = vmatpush2.bf16.msra.mxu0 0
  %141 = vmatprep.subr.bf16.mxu0 0
  %142 = vmatpush2.bf16.msra.mxu0 0
  %143 = vmatprep.mubr.bf16.mxu0 0
  %144 = vmatmul.mubr.bf16.gmra.mxu0 %v109
  %v145 = vpop.f32.mrf.mxu0
  %v146 = vadd.f32 0.0, %v145
  %v147 = vpop.f32.mrf.mxu0
  %v148 = vpop.f32.mrf.mxu0
  %v149 = vpop.f32.mrf.mxu0
  %150 = vdwg.mxu0
  %v151 = vld [vmem:[%s1] sm:$0x1]
  %v152 = vld [vmem:[%s3] sm:$0xf]
  %v153 = vld [vmem:[%s3 + $0x4] sm:$0xf]
  %v154 = vld [vmem:[%s5] sm:$0x1]
  %v156 = vlaneseq
  %v157 = vshrl.u32 %v156, 7
  %v158 = vsub.s32 0, %v157
  %v159 = vrot.slane %v154, %v158
  %v163 = vunpack.c.l.b16 %v152
  %v164 = vunpack.c.l.b16 %v153
  %v165 = vpack.c.b16 %v164, %v163
  %v168 = vsel %vm107, %v151, 0
  %170 = vmatprep.subr.bf16.mxu0 0
  %171 = vmatpush1.bf16.msra.mxu0 0
  %172 = vmatprep.subr.bf16.mxu0 0
  %173 = vmatpush1.bf16.msra.mxu0 0
  %174 = vmatprep.subr.bf16.mxu0 0
  %175 = vmatpush1.bf16.msra.mxu0 0
  %176 = vmatprep.subr.bf16.mxu0 0
  %177 = vmatpush1.bf16.msra.mxu0 0
  %178 = vmatprep.subr.bf16.mxu0 0
  %179 = vmatpush1.bf16.msra.mxu0 0
  %180 = vmatprep.subr.bf16.mxu0 0
  %181 = vmatpush1.bf16.msra.mxu0 0
  %182 = vmatprep.subr.bf16.mxu0 0
  %183 = vmatpush1.bf16.msra.mxu0 0
  %184 = vmatprep.subr.bf16.mxu0 0
  %185 = vmatpush1.bf16.msra.mxu0 %v165
  %186 = vmatprep.subr.bf16.mxu0 0
  %187 = vmatpush2.bf16.msra.mxu0 0
  %188 = vmatprep.subr.bf16.mxu0 0
  %189 = vmatpush2.bf16.msra.mxu0 0
  %190 = vmatprep.subr.bf16.mxu0 0
  %191 = vmatpush2.bf16.msra.mxu0 0
  %192 = vmatprep.subr.bf16.mxu0 0
  %193 = vmatpush2.bf16.msra.mxu0 0
  %194 = vmatprep.subr.bf16.mxu0 0
  %195 = vmatpush2.bf16.msra.mxu0 0
  %196 = vmatprep.subr.bf16.mxu0 0
  %197 = vmatpush2.bf16.msra.mxu0 0
  %198 = vmatprep.subr.bf16.mxu0 0
  %199 = vmatpush2.bf16.msra.mxu0 0
  %200 = vmatprep.subr.bf16.mxu0 0
  %201 = vmatpush2.bf16.msra.mxu0 0
  %202 = vmatprep.mubr.bf16.mxu0 0
  %203 = vmatmul.mubr.bf16.gmra.mxu0 %v168
  %v204 = vpop.f32.mrf.mxu0
  %v205 = vadd.f32 %v159, %v204
  %v206 = vpop.f32.mrf.mxu0
  %v207 = vpop.f32.mrf.mxu0
  %v208 = vpop.f32.mrf.mxu0
  %209 = vdwg.mxu0
  %v210 = vld [vmem:[%s7] sm:$0x1]
  %v212 = vlaneseq
  %v213 = vshrl.u32 %v212, 7
  %v214 = vsub.s32 0, %v213
  %v215 = vrot.slane %v210, %v214
  %216 = vrot.lane.b32.xlu0 %v215, 64
  %v217 = vpop.permute.xlu0 %216
  %v219 = vadd.f32 %v93, %v217
  %v220 = vlaneseq
  %v221 = vshrl.u32 %v220, 7
  %v222 = vsub.s32 0, %v221
  %v223 = vrot.slane %v205, %v222
  %v224 = vadd.f32 %v146, %v223
  %v225 = vadd.f32 %v224, %v93
  %v226 = vmul.f32 %v225, 0.5
  %v227 = vtanh.pop %v226
  %v228 = vadd.f32 %v227, 1.0
  %v229 = vmul.f32 %v228, 0.5
  %231 = vrot.lane.b32.xlu0 %v219, 64
  %v232 = vpop.permute.xlu0 %231
  %v234 = vmul.f32 %v229, %v232
  %236 = vrot.lane.b32.xlu0 %v234, 64
  %v237 = vpop.permute.xlu0 %236
  %v239 = vadd.f32 %v224, %v237
  %v240 = vtanh.pop %v239
  %v241 = vsub.f32 1.0, %v229
  %243 = vrot.lane.b32.xlu0 %v240, 96
  %v244 = vpop.permute.xlu0 %243
  %v246 = vmul.f32 %v241, %v244
  %248 = vrot.lane.b32.xlu0 %v36, 32
  %v249 = vpop.permute.xlu0 %248
  %v251 = vmul.f32 %v229, %v249
  %v252 = vadd.f32 %v246, %v251
  %v253 = vpack.c.bf16 %v252, %v252
  %v254 = vld [vmem:[%s8] sm:$0xf]
  %v255 = vld [vmem:[%s8 + $0x4] sm:$0xf]
  %v256 = vld [vmem:[%s8 + $0x8] sm:$0xf]
  %v257 = vld [vmem:[%s8 + $0xc] sm:$0xf]
  %v258 = vld [vmem:[%s9] sm:$0x1]
  %v260 = vlaneseq
  %v261 = vshrl.u32 %v260, 7
  %v262 = vsub.s32 0, %v261
  %v263 = vrot.slane %v258, %v262
  %266 = vrot.lane.b32.xlu0 %v253, 96
  %v267 = vpop.permute.xlu0 %266
  %v272 = vunpack.c.l.b16 %v254
  %v273 = vunpack.c.l.b16 %v255
  %v274 = vunpack.c.l.b16 %v256
  %v275 = vunpack.c.l.b16 %v257
  %v276 = vpack.c.b16 %v273, %v272
  %v277 = vpack.c.b16 %v275, %v274
  %v281 = vsel %vm54, %v267, 0
  %283 = vmatprep.subr.bf16.mxu0 0
  %284 = vmatpush1.bf16.msra.mxu0 0
  %285 = vmatprep.subr.bf16.mxu0 0
  %286 = vmatpush1.bf16.msra.mxu0 0
  %287 = vmatprep.subr.bf16.mxu0 0
  %288 = vmatpush1.bf16.msra.mxu0 0
  %289 = vmatprep.subr.bf16.mxu0 0
  %290 = vmatpush1.bf16.msra.mxu0 0
  %291 = vmatprep.subr.bf16.mxu0 0
  %292 = vmatpush1.bf16.msra.mxu0 0
  %293 = vmatprep.subr.bf16.mxu0 0
  %294 = vmatpush1.bf16.msra.mxu0 0
  %295 = vmatprep.subr.bf16.mxu0 0
  %296 = vmatpush1.bf16.msra.mxu0 %v277
  %297 = vmatprep.subr.bf16.mxu0 0
  %298 = vmatpush1.bf16.msra.mxu0 %v276
  %299 = vmatprep.subr.bf16.mxu0 0
  %300 = vmatpush2.bf16.msra.mxu0 0
  %301 = vmatprep.subr.bf16.mxu0 0
  %302 = vmatpush2.bf16.msra.mxu0 0
  %303 = vmatprep.subr.bf16.mxu0 0
  %304 = vmatpush2.bf16.msra.mxu0 0
  %305 = vmatprep.subr.bf16.mxu0 0
  %306 = vmatpush2.bf16.msra.mxu0 0
  %307 = vmatprep.subr.bf16.mxu0 0
  %308 = vmatpush2.bf16.msra.mxu0 0
  %309 = vmatprep.subr.bf16.mxu0 0
  %310 = vmatpush2.bf16.msra.mxu0 0
  %311 = vmatprep.subr.bf16.mxu0 0
  %312 = vmatpush2.bf16.msra.mxu0 0
  %313 = vmatprep.subr.bf16.mxu0 0
  %314 = vmatpush2.bf16.msra.mxu0 0
  %315 = vmatprep.mubr.bf16.mxu0 0
  %316 = vmatmul.mubr.bf16.gmra.mxu0 %v281
  %v317 = vpop.f32.mrf.mxu0
  %v318 = vadd.f32 %v263, %v317
  %v319 = vpop.f32.mrf.mxu0
  %v320 = vpop.f32.mrf.mxu0
  %v321 = vpop.f32.mrf.mxu0
  %322 = vdwg.mxu0
  %v323 = vlaneseq
  %v324 = vshrl.u32 %v323, 7
  %v325 = vsub.s32 1, %v324
  %v326 = vrot.slane %v205, %v325
  %v327 = vadd.f32 %v146, %v326
  %v328 = vadd.f32 %v327, %v93
  %v329 = vmul.f32 %v328, 0.5
  %v330 = vtanh.pop %v329
  %v331 = vadd.f32 %v330, 1.0
  %v332 = vmul.f32 %v331, 0.5
  %v333 = vmul.f32 %v332, %v232
  %335 = vrot.lane.b32.xlu0 %v333, 64
  %v336 = vpop.permute.xlu0 %335
  %v338 = vadd.f32 %v327, %v336
  %v339 = vtanh.pop %v338
  %v340 = vsub.f32 1.0, %v332
  %342 = vrot.lane.b32.xlu0 %v339, 96
  %v343 = vpop.permute.xlu0 %342
  %v345 = vmul.f32 %v340, %v343
  %v346 = vmul.f32 %v332, %v249
  %v347 = vadd.f32 %v345, %v346
  %v348 = vpack.c.bf16 %v347, %v347
  %350 = vrot.lane.b32.xlu0 %v348, 96
  %v351 = vpop.permute.xlu0 %350
  %v353 = vsel %vm54, %v351, 0
  %355 = vmatprep.subr.bf16.mxu0 0
  %356 = vmatpush1.bf16.msra.mxu0 0
  %357 = vmatprep.subr.bf16.mxu0 0
  %358 = vmatpush1.bf16.msra.mxu0 0
  %359 = vmatprep.subr.bf16.mxu0 0
  %360 = vmatpush1.bf16.msra.mxu0 0
  %361 = vmatprep.subr.bf16.mxu0 0
  %362 = vmatpush1.bf16.msra.mxu0 0
  %363 = vmatprep.subr.bf16.mxu0 0
  %364 = vmatpush1.bf16.msra.mxu0 0
  %365 = vmatprep.subr.bf16.mxu0 0
  %366 = vmatpush1.bf16.msra.mxu0 0
  %367 = vmatprep.subr.bf16.mxu0 0
  %368 = vmatpush1.bf16.msra.mxu0 %v277
  %369 = vmatprep.subr.bf16.mxu0 0
  %370 = vmatpush1.bf16.msra.mxu0 %v276
  %371 = vmatprep.subr.bf16.mxu0 0
  %372 = vmatpush2.bf16.msra.mxu0 0
  %373 = vmatprep.subr.bf16.mxu0 0
  %374 = vmatpush2.bf16.msra.mxu0 0
  %375 = vmatprep.subr.bf16.mxu0 0
  %376 = vmatpush2.bf16.msra.mxu0 0
  %377 = vmatprep.subr.bf16.mxu0 0
  %378 = vmatpush2.bf16.msra.mxu0 0
  %379 = vmatprep.subr.bf16.mxu0 0
  %380 = vmatpush2.bf16.msra.mxu0 0
  %381 = vmatprep.subr.bf16.mxu0 0
  %382 = vmatpush2.bf16.msra.mxu0 0
  %383 = vmatprep.subr.bf16.mxu0 0
  %384 = vmatpush2.bf16.msra.mxu0 0
  %385 = vmatprep.subr.bf16.mxu0 0
  %386 = vmatpush2.bf16.msra.mxu0 0
  %387 = vmatprep.mubr.bf16.mxu0 0
  %388 = vmatmul.mubr.bf16.gmra.mxu0 %v353
  %v389 = vpop.f32.mrf.mxu0
  %v390 = vadd.f32 %v263, %v389
  %v391 = vpop.f32.mrf.mxu0
  %v392 = vpop.f32.mrf.mxu0
  %v393 = vpop.f32.mrf.mxu0
  %394 = vdwg.mxu0
  %396 = vrot.lane.b32.xlu0 %v390, 4
  %v397 = vpop.permute.xlu0 %396
  %vm399 = vcmask 31744
  %v400 = vsel %vm399, %v318, %v397
  %vm401 = vcmask 64512
  %402 = vst.msk [vmem:[%s10] sm:$0xff] %vm401, %v400
  // Predicated region
  $region42: #{rec_enc_forward.3} parent=0 // pred_check
    _
  $region43: #{rec_enc_forward.3} parent=0 // pred_check_branch
    %404 = sbr.rel (0) target = $region45
  $region44: #{rec_enc_forward.3} parent=0 // pred_region
    _
  $region45: #{rec_enc_forward.3} parent=0 // pred_fallthru
    _
  // Predicated region
  $region46: #{rec_enc_forward.3} parent=0 // pred_check
    _
  $region47: #{rec_enc_forward.3} parent=0 // pred_check_branch
    %406 = sbr.rel (0) target = $region49
  $region48: #{rec_enc_forward.3} parent=0 // pred_region
    _
  $region49: #{rec_enc_forward.3} parent=0 // pred_fallthru
    _

</llo_original>
